<compile_context>
chip_gen: v7x
topology: tpu7x:2x2x1
jax: 0.10.0
libtpu: 0.0.40
codegen_flags: <defaults>
</compile_context>

<pallas_src>
import itertools

import jax
import jax.numpy as jnp
from jax import lax
from jax.experimental import pallas as pl
from jax.experimental.pallas import tpu as pltpu

# ----------------------------------------------------------------------------
# Small, self-consistent config (proxy for InternalWav2AllConfig + wav2vec2)
# ----------------------------------------------------------------------------
B = 2            # batch
T = 8            # encoder frames (after "feature extraction")
FRAME = 40       # proxy for the wav2vec2 conv feature-extractor downsampling
L = T * FRAME    # raw waveform length
H = 32           # wav2vec2_config.output_hidden_size (proxy for 768)
FFN_DIM = 64     # config.ffn_dim (proxy for 512)
N_SPK = 2        # config.num_speakers
N_NOISE = 2      # config.num_noises
VOCAB = 16       # ASR vocab size (proxy)
N_LAYERS = 5     # encoder layers -> hidden_states has N_LAYERS+1 entries
DIAR_LAYER_ID = 4
CLF_LAYER_ID = 4
ASR_LOSS_W = 1.0
DIAR_LOSS_W = 1.0
CLF_LOSS_W = 1.0

SLAB = 128                       # lane-dense head-output slab width
ASR_OFF = 0                      # slab columns [0, VOCAB)          : asr logits
DIAR_OFF = VOCAB                 # slab columns [VOCAB, +N_SPK)     : diar logits
CLF_OFF = VOCAB + N_SPK          # slab columns [.., +N_NOISE)      : per-frame clf logits
assert CLF_OFF + N_NOISE <= SLAB
# NOTE(v6e/v7x scale-up): widen SLAB to 256 to fill the 256-lane MXU; keep 128 on v5e.

VMEM_LIMIT_BYTES = 32 * 1024 * 1024   # documented budget; proxy uses ~80 KiB


# ----------------------------------------------------------------------------
# Single fused Pallas kernel: encoder + all heads -> one (rows, SLAB) slab
# ----------------------------------------------------------------------------
def _wav2all_fused_kernel(frames_ref, feat_w_ref, feat_b_ref,
                          lw_ref, lb_ref,
                          lm_w_ref, d1_w_ref, d1_b_ref,
                          c1_w_ref, c1_b_ref,
                          d2_w_ref, c2_w_ref, head_b_ref,
                          slab_ref):
    f32 = jnp.float32
    bf16 = jnp.bfloat16

    def mm(a_bf16, w_bf16):
        # bf16 MXU operands, f32 accumulation
        return jnp.dot(a_bf16, w_bf16, preferred_element_type=f32)

    # hidden_states[0]: proxy feature projection + tanh (frames already bf16)
    h = jnp.tanh(mm(frames_ref[...], feat_w_ref[...]) + feat_b_ref[...])
    h_diar = h
    h_clf = h
    # Encoder layers, statically unrolled (OK for the 5-layer proxy; at 12-24
    # layers stream weights over a grid axis / lax.fori_loop instead).
    for i in range(N_LAYERS):
        h = jnp.tanh(mm(h.astype(bf16), lw_ref[i]) + lb_ref[i])
        if i + 1 == DIAR_LAYER_ID:
            h_diar = h
        if i + 1 == CLF_LAYER_ID:
            h_clf = h

    # Hoisted bf16 casts: each shared activation is cast exactly once.
    h_last_bf = h.astype(bf16)
    h_diar_bf = h_diar.astype(bf16)
    h_clf_bf = h_diar_bf if (h_clf is h_diar) else h_clf.astype(bf16)

    # Head first layers (no nonlinearity between the two Linears, per spec).
    hd = mm(h_diar_bf, d1_w_ref[...]) + d1_b_ref[...]           # (rows, FFN)
    hc = mm(h_clf_bf, c1_w_ref[...]) + c1_b_ref[...]            # (rows, FFN)

    # ASR lm_head + diarization FFN-2 + per-frame classification FFN-2 are
    # zero-padded into disjoint column ranges of one 128-wide slab, so their
    # contributions simply add and the store is a single unmasked full-lane vst.
    slab_ref[...] = (mm(h_last_bf, lm_w_ref[...])
                     + mm(hd.astype(bf16), d2_w_ref[...])
                     + mm(hc.astype(bf16), c2_w_ref[...])
                     + head_b_ref[...])                         # (rows, SLAB) f32


def _run_fused(packed, frames_bf16):
    vmem = pltpu.MemorySpace.VMEM

    def resident(arr):
        # Whole weight array resident in VMEM; same block for every grid step.
        nd = arr.ndim
        return pl.BlockSpec(arr.shape, lambda b, _nd=nd: (0,) * _nd,
                            memory_space=vmem)

    in_specs = [
        pl.BlockSpec((T, FRAME), lambda b: (b, 0), memory_space=vmem),  # frames
        resident(packed["feat_w"]), resident(packed["feat_b"]),
        resident(packed["lw"]), resident(packed["lb"]),
        resident(packed["lm_w"]),
        resident(packed["d1_w"]), resident(packed["d1_b"]),
        resident(packed["c1_w"]), resident(packed["c1_b"]),
        resident(packed["d2_w"]), resident(packed["c2_w"]),
        resident(packed["head_b"]),
    ]
    out_specs = pl.BlockSpec((T, SLAB), lambda b: (b, 0), memory_space=vmem)

    return pl.pallas_call(
        _wav2all_fused_kernel,
        grid=(B,),                       # one utterance per grid step
        in_specs=in_specs,
        out_specs=out_specs,
        out_shape=jax.ShapeDtypeStruct((B * T, SLAB), jnp.float32),
        compiler_params=pltpu.CompilerParams(
            dimension_semantics=("parallel",),      # v7x: shard over 2 TCs
            vmem_limit_bytes=VMEM_LIMIT_BYTES),
    )(frames_bf16,
      packed["feat_w"], packed["feat_b"],
      packed["lw"], packed["lb"],
      packed["lm_w"], packed["d1_w"], packed["d1_b"],
      packed["c1_w"], packed["c1_b"],
      packed["d2_w"], packed["c2_w"], packed["head_b"])


# ----------------------------------------------------------------------------
# Losses (tiny glue, plain JAX)
# ----------------------------------------------------------------------------
def batch_pit_loss(diarization_labels, diarization_logits, num_speakers):
    """Permutation-invariant BCE-with-logits; returns (loss, best_alignments)."""
    perms = list(itertools.permutations(range(num_speakers)))
    per_perm = []
    for p in perms:
        lab = diarization_labels[..., list(p)]                 # (B, T, S)
        lg = diarization_logits
        bce = jnp.maximum(lg, 0.0) - lg * lab + jnp.log1p(jnp.exp(-jnp.abs(lg)))
        per_perm.append(jnp.mean(bce, axis=(1, 2)))            # (B,)
    per_perm = jnp.stack(per_perm, axis=1)                     # (B, P)
    best_idx = jnp.argmin(per_perm, axis=1)                    # (B,)
    loss = jnp.mean(jnp.min(per_perm, axis=1))
    perm_arr = jnp.asarray(perms, dtype=jnp.int32)             # (P, S)
    best_alignments = perm_arr[best_idx]                       # (B, S)
    return loss, best_alignments


def cross_entropy_loss(logits, labels):
    """nn.CrossEntropyLoss() (mean reduction)."""
    logz = jax.nn.logsumexp(logits, axis=-1)
    picked = jnp.take_along_axis(logits, labels[:, None], axis=-1)[:, 0]
    return jnp.mean(logz - picked)


def ctc_loss(logits, labels, blank_id=0):
    """CTC negative log-likelihood via the forward algorithm (plain JAX).

    logits: (B, T, V); labels: (B, U), all entries valid (no padding).
    # TODO(synk): HF Wav2Vec2ForCTC uses sum reduction and attention-mask
    # derived input lengths; this proxy uses full length T and mean reduction.
    """
    NEG = -1e30
    logp = jax.nn.log_softmax(logits.astype(jnp.float32), axis=-1)  # (B,T,V)
    Bb, Tt, _ = logp.shape
    U = labels.shape[1]
    S = 2 * U + 1
    ext = jnp.full((Bb, S), blank_id, dtype=labels.dtype).at[:, 1::2].set(labels)
    idx = jnp.broadcast_to(ext[:, None, :], (Bb, Tt, S))
    emit = jnp.take_along_axis(logp, idx, axis=2)                   # (B,T,S)
    ext_m2 = jnp.pad(ext, ((0, 0), (2, 0)), constant_values=-1)[:, :S]
    allow_skip = (ext != blank_id) & (ext != ext_m2)                # (B,S)

    alpha = jnp.full((Bb, S), NEG, jnp.float32)
    alpha = alpha.at[:, 0].set(emit[:, 0, 0]).at[:, 1].set(emit[:, 0, 1])

    def step(a, e_t):
        a2 = jnp.pad(a, ((0, 0), (1, 0)), constant_values=NEG)[:, :S]
        a3 = jnp.where(allow_skip,
                       jnp.pad(a, ((0, 0), (2, 0)), constant_values=NEG)[:, :S],
                       NEG)
        return jnp.logaddexp(jnp.logaddexp(a, a2), a3) + e_t, None

    alpha, _ = lax.scan(step, alpha, jnp.swapaxes(emit, 0, 1)[1:])
    ll = jnp.logaddexp(alpha[:, S - 1], alpha[:, S - 2])
    return -jnp.mean(ll)


# ----------------------------------------------------------------------------
# Parameters
# ----------------------------------------------------------------------------
def init_params(key):
    def lin(key, fan_in, fan_out):
        kw, kb = jax.random.split(key)
        w = jax.random.normal(kw, (fan_in, fan_out), jnp.float32) * 0.02
        b = jax.random.normal(kb, (fan_out,), jnp.float32) * 0.02
        return w, b

    keys = jax.random.split(key, 3 + N_LAYERS + 4)
    params = {}
    params["feat"] = lin(keys[0], FRAME, H)                    # proxy feature projection
    params["layers"] = [lin(keys[1 + i], H, H) for i in range(N_LAYERS)]
    params["lm_head"] = lin(keys[1 + N_LAYERS], H, VOCAB)      # ASR head
    params["diar1"] = lin(keys[2 + N_LAYERS], H, FFN_DIM)
    params["diar2"] = lin(keys[3 + N_LAYERS], FFN_DIM, N_SPK)
    params["clf1"] = lin(keys[4 + N_LAYERS], H, FFN_DIM)
    params["clf2"] = lin(keys[5 + N_LAYERS], FFN_DIM, N_NOISE)
    return params


def pack_params(p):
    """Stack / zero-pad / bf16-cast parameters into kernel-ready arrays (once)."""
    f32, bf16 = jnp.float32, jnp.bfloat16
    feat_w, feat_b = p["feat"]
    lm_w, lm_b = p["lm_head"]
    d1_w, d1_b = p["diar1"]
    d2_w, d2_b = p["diar2"]
    c1_w, c1_b = p["clf1"]
    c2_w, c2_b = p["clf2"]

    lw = jnp.stack([w for (w, _) in p["layers"]]).astype(bf16)        # (L,H,H)
    lb = jnp.stack([b.reshape(1, H) for (_, b) in p["layers"]])       # (L,1,H) f32

    # Head second layers packed into disjoint columns of a 128-wide slab.
    lm_w_pad = (jnp.zeros((H, SLAB), f32)
                .at[:, ASR_OFF:ASR_OFF + VOCAB].set(lm_w).astype(bf16))
    d2_w_pad = (jnp.zeros((FFN_DIM, SLAB), f32)
                .at[:, DIAR_OFF:DIAR_OFF + N_SPK].set(d2_w).astype(bf16))
    c2_w_pad = (jnp.zeros((FFN_DIM, SLAB), f32)
                .at[:, CLF_OFF:CLF_OFF + N_NOISE].set(c2_w).astype(bf16))
    head_b = (jnp.zeros((1, SLAB), f32)
              .at[0, ASR_OFF:ASR_OFF + VOCAB].set(lm_b)
              .at[0, DIAR_OFF:DIAR_OFF + N_SPK].set(d2_b)
              .at[0, CLF_OFF:CLF_OFF + N_NOISE].set(c2_b))

    return dict(
        feat_w=feat_w.astype(bf16),              # (FRAME, H), unpadded
        feat_b=feat_b.reshape(1, H),             # biases stay f32
        lw=lw, lb=lb,
        lm_w=lm_w_pad,
        d1_w=d1_w.astype(bf16), d1_b=d1_b.reshape(1, FFN_DIM),
        c1_w=c1_w.astype(bf16), c1_b=c1_b.reshape(1, FFN_DIM),
        d2_w=d2_w_pad, c2_w=c2_w_pad, head_b=head_b)


# ----------------------------------------------------------------------------
# Pure-JAX f32 reference of the fused kernel (encoder + heads), for tolerance
# testing the bf16 Pallas path.
# ----------------------------------------------------------------------------
def _forward_ref(params, input_values):
    frames = input_values.reshape(B * T, FRAME)
    w, b_ = params["feat"]
    h = jnp.tanh(frames @ w + b_)
    taps = {0: h}
    for i, (lw_i, lb_i) in enumerate(params["layers"]):
        h = jnp.tanh(h @ lw_i + lb_i)
        taps[i + 1] = h
    lm_w, lm_b = params["lm_head"]
    asr = (h @ lm_w + lm_b).reshape(B, T, VOCAB)
    d1w, d1b = params["diar1"]; d2w, d2b = params["diar2"]
    diar = ((taps[DIAR_LAYER_ID] @ d1w + d1b) @ d2w + d2b).reshape(B, T, N_SPK)
    c1w, c1b = params["clf1"]; c2w, c2b = params["clf2"]
    clf = ((taps[CLF_LAYER_ID] @ c1w + c1b) @ c2w + c2b).reshape(B, T, N_NOISE)
    return asr, diar, clf.mean(axis=1)


# ----------------------------------------------------------------------------
# Wav2All forward
# ----------------------------------------------------------------------------
def wav2all_forward(packed, input_values, attention_mask=None, labels=None,
                    diarization_labels=None, classification_labels=None):
    # --- proxy wav2vec2 backbone + all heads in ONE fused Pallas kernel ---
    # TODO(synk): the pretrained Wav2Vec2ForCTC conv+transformer backbone is not
    # reproducible here; replaced by a deterministic Pallas linear+tanh encoder.
    frames = input_values.reshape(B * T, FRAME).astype(jnp.bfloat16)   # unpadded, bf16
    slab = _run_fused(packed, frames).reshape(B, T, SLAB)

    asr_logits = slab[..., ASR_OFF:ASR_OFF + VOCAB]
    diar_logits = slab[..., DIAR_OFF:DIAR_OFF + N_SPK]
    # classification_ffn(h).mean(dim=1): per-frame FFN logits come out of the
    # slab; the tiny (B, T, N_NOISE) mean over T is done here (exact).
    clf_logits = jnp.mean(slab[..., CLF_OFF:CLF_OFF + N_NOISE], axis=1)

    ret = {}
    total_loss = jnp.float32(0.0)

    # --- ASR head + CTC loss ---
    if ASR_LOSS_W > 0:
        asr_loss = ctc_loss(asr_logits, labels)
        ret["asr_logits"] = asr_logits
        ret["asr_loss"] = asr_loss
        ret["asr_labels"] = labels
        total_loss = total_loss + asr_loss * ASR_LOSS_W

    # --- diarization head + PIT loss ---
    if DIAR_LOSS_W > 0:
        diar_loss, best_alignments = batch_pit_loss(diarization_labels,
                                                    diar_logits, N_SPK)
        ret["diarization_loss"] = diar_loss
        ret["diarization_logits"] = diar_logits
        ret["diarization_alignment"] = best_alignments
        total_loss = total_loss + diar_loss * DIAR_LOSS_W

    # --- classification head + CE ---
    if CLF_LOSS_W > 0:
        clf_loss = cross_entropy_loss(clf_logits, classification_labels)
        ret["classification_loss"] = clf_loss
        ret["classification_logits"] = clf_logits
        ret["classification_labels"] = classification_labels
        total_loss = total_loss + clf_loss * CLF_LOSS_W

    ret["loss"] = total_loss
    return ret


# ----------------------------------------------------------------------------
if __name__ == "__main__":
    key = jax.random.PRNGKey(0)
    k_param, k_wave, k_diar, k_clf, k_ctc = jax.random.split(key, 5)

    params = init_params(k_param)
    packed = pack_params(params)

    input_values = jax.random.normal(k_wave, (B, L), jnp.float32)       # raw audio
    attention_mask = jnp.ones((B, L), jnp.int32)
    ctc_labels = jax.random.randint(k_ctc, (B, 4), 1, VOCAB)            # ASR labels
    diarization_labels = jax.random.bernoulli(k_diar, 0.5,
                                              (B, T, N_SPK)).astype(jnp.float32)
    classification_labels = jax.random.randint(k_clf, (B,), 0, N_NOISE)

    fwd = jax.jit(wav2all_forward)
    out = fwd(packed, input_values,
              attention_mask=attention_mask,
              labels=ctc_labels,
              diarization_labels=diarization_labels,
              classification_labels=classification_labels)

    jax.block_until_ready(out["loss"])
    jax.block_until_ready(out["diarization_logits"])
    jax.block_until_ready(out["classification_logits"])
    jax.block_until_ready(out["asr_logits"])

    assert out["asr_logits"].shape == (B, T, VOCAB)
    assert out["diarization_logits"].shape == (B, T, N_SPK)
    assert out["classification_logits"].shape == (B, N_NOISE)
    assert out["diarization_alignment"].shape == (B, N_SPK)
    assert bool(jnp.isfinite(out["loss"]))

    # Tolerance-check the bf16 Pallas path against a pure-JAX f32 reference.
    asr_ref, diar_ref, clf_ref = _forward_ref(params, input_values)
    assert jnp.allclose(out["asr_logits"], asr_ref, atol=3e-2, rtol=3e-2)
    assert jnp.allclose(out["diarization_logits"], diar_ref, atol=3e-2, rtol=3e-2)
    assert jnp.allclose(out["classification_logits"], clf_ref, atol=3e-2, rtol=3e-2)

    print("KERNEL_OK")
</pallas_src>

<mosaic_0001>
module attributes {stable_mosaic.version = 11 : i64} {
  func.func @_wav2all_fused_kernel(%arg0: i32, %arg1: memref<8x40xbf16, #tpu.memory_space<vmem>>, %arg2: memref<40x32xbf16, #tpu.memory_space<vmem>>, %arg3: memref<1x32xf32, #tpu.memory_space<vmem>>, %arg4: memref<5x32x32xbf16, #tpu.memory_space<vmem>>, %arg5: memref<5x1x32xf32, #tpu.memory_space<vmem>>, %arg6: memref<32x128xbf16, #tpu.memory_space<vmem>>, %arg7: memref<32x64xbf16, #tpu.memory_space<vmem>>, %arg8: memref<1x64xf32, #tpu.memory_space<vmem>>, %arg9: memref<32x64xbf16, #tpu.memory_space<vmem>>, %arg10: memref<1x64xf32, #tpu.memory_space<vmem>>, %arg11: memref<64x128xbf16, #tpu.memory_space<vmem>>, %arg12: memref<64x128xbf16, #tpu.memory_space<vmem>>, %arg13: memref<1x128xf32, #tpu.memory_space<vmem>>, %arg14: memref<8x128xf32, #tpu.memory_space<vmem>>) attributes {dimension_semantics = [#tpu.dimension_semantics<parallel>], iteration_bounds = array<i64: 2>, scalar_prefetch = 0 : i64, scratch_operands = 0 : i64, tpu.core_type = #tpu.core_type<tc>, window_params = [{transform_indices = @transform_0, window_bounds = array<i64: 8, 40>}, {pipeline_mode = #tpu.pipeline_mode<synchronous>, transform_indices = @transform_1, window_bounds = array<i64: 40, 32>}, {pipeline_mode = #tpu.pipeline_mode<synchronous>, transform_indices = @transform_2, window_bounds = array<i64: 1, 32>}, {pipeline_mode = #tpu.pipeline_mode<synchronous>, transform_indices = @transform_3, window_bounds = array<i64: 5, 32, 32>}, {pipeline_mode = #tpu.pipeline_mode<synchronous>, transform_indices = @transform_4, window_bounds = array<i64: 5, 1, 32>}, {pipeline_mode = #tpu.pipeline_mode<synchronous>, transform_indices = @transform_5, window_bounds = array<i64: 32, 128>}, {pipeline_mode = #tpu.pipeline_mode<synchronous>, transform_indices = @transform_6, window_bounds = array<i64: 32, 64>}, {pipeline_mode = #tpu.pipeline_mode<synchronous>, transform_indices = @transform_7, window_bounds = array<i64: 1, 64>}, {pipeline_mode = #tpu.pipeline_mode<synchronous>, transform_indices = @transform_8, window_bounds = array<i64: 32, 64>}, {pipeline_mode = #tpu.pipeline_mode<synchronous>, transform_indices = @transform_9, window_bounds = array<i64: 1, 64>}, {pipeline_mode = #tpu.pipeline_mode<synchronous>, transform_indices = @transform_10, window_bounds = array<i64: 64, 128>}, {pipeline_mode = #tpu.pipeline_mode<synchronous>, transform_indices = @transform_11, window_bounds = array<i64: 64, 128>}, {pipeline_mode = #tpu.pipeline_mode<synchronous>, transform_indices = @transform_12, window_bounds = array<i64: 1, 128>}, {transform_indices = @transform_13, window_bounds = array<i64: 8, 128>}]} {
    %c0 = arith.constant 0 : index
    %c0_0 = arith.constant 0 : index
    %0 = vector.load %arg1[%c0, %c0_0] : memref<8x40xbf16, #tpu.memory_space<vmem>>, vector<8x40xbf16>
    %c0_1 = arith.constant 0 : index
    %c0_2 = arith.constant 0 : index
    %1 = vector.load %arg2[%c0_1, %c0_2] : memref<40x32xbf16, #tpu.memory_space<vmem>>, vector<40x32xbf16>
    %cst = arith.constant dense<0.000000e+00> : vector<8x32xf32>
    %2 = tpu.matmul %0, %1, %cst {dimension_numbers = #tpu.dot_dimension_numbers<[1], [0], [0], [1], [0, 0, 1, 1], [], []>} : vector<8x40xbf16>, vector<40x32xbf16>, vector<8x32xf32> -> vector<8x32xf32>
    %c0_3 = arith.constant 0 : index
    %c0_4 = arith.constant 0 : index
    %3 = vector.load %arg3[%c0_3, %c0_4] : memref<1x32xf32, #tpu.memory_space<vmem>>, vector<1x32xf32>
    %4 = vector.broadcast %3 : vector<1x32xf32> to vector<8x32xf32>
    %5 = arith.addf %2, %4 : vector<8x32xf32>
    %6 = math.tanh %5 : vector<8x32xf32>
    %7 = arith.truncf %6 : vector<8x32xf32> to vector<8x32xbf16>
    %c0_5 = arith.constant 0 : index
    %c0_6 = arith.constant 0 : index
    %c0_7 = arith.constant 0 : index
    %8 = vector.load %arg4[%c0_5, %c0_6, %c0_7] : memref<5x32x32xbf16, #tpu.memory_space<vmem>>, vector<1x32x32xbf16>
    %9 = vector.shape_cast %8 : vector<1x32x32xbf16> to vector<32x32xbf16>
    %cst_8 = arith.constant dense<0.000000e+00> : vector<8x32xf32>
    %10 = tpu.matmul %7, %9, %cst_8 {dimension_numbers = #tpu.dot_dimension_numbers<[1], [0], [0], [1], [0, 0, 1, 1], [], []>} : vector<8x32xbf16>, vector<32x32xbf16>, vector<8x32xf32> -> vector<8x32xf32>
    %c0_9 = arith.constant 0 : index
    %c0_10 = arith.constant 0 : index
    %c0_11 = arith.constant 0 : index
    %11 = vector.load %arg5[%c0_9, %c0_10, %c0_11] : memref<5x1x32xf32, #tpu.memory_space<vmem>>, vector<1x1x32xf32>
    %12 = vector.shape_cast %11 : vector<1x1x32xf32> to vector<1x32xf32>
    %13 = vector.broadcast %12 : vector<1x32xf32> to vector<8x32xf32>
    %14 = arith.addf %10, %13 : vector<8x32xf32>
    %15 = math.tanh %14 : vector<8x32xf32>
    %16 = arith.truncf %15 : vector<8x32xf32> to vector<8x32xbf16>
    %c1 = arith.constant 1 : index
    %c0_12 = arith.constant 0 : index
    %c0_13 = arith.constant 0 : index
    %17 = vector.load %arg4[%c1, %c0_12, %c0_13] : memref<5x32x32xbf16, #tpu.memory_space<vmem>>, vector<1x32x32xbf16>
    %18 = vector.shape_cast %17 : vector<1x32x32xbf16> to vector<32x32xbf16>
    %cst_14 = arith.constant dense<0.000000e+00> : vector<8x32xf32>
    %19 = tpu.matmul %16, %18, %cst_14 {dimension_numbers = #tpu.dot_dimension_numbers<[1], [0], [0], [1], [0, 0, 1, 1], [], []>} : vector<8x32xbf16>, vector<32x32xbf16>, vector<8x32xf32> -> vector<8x32xf32>
    %c1_15 = arith.constant 1 : index
    %c0_16 = arith.constant 0 : index
    %c0_17 = arith.constant 0 : index
    %20 = vector.load %arg5[%c1_15, %c0_16, %c0_17] : memref<5x1x32xf32, #tpu.memory_space<vmem>>, vector<1x1x32xf32>
    %21 = vector.shape_cast %20 : vector<1x1x32xf32> to vector<1x32xf32>
    %22 = vector.broadcast %21 : vector<1x32xf32> to vector<8x32xf32>
    %23 = arith.addf %19, %22 : vector<8x32xf32>
    %24 = math.tanh %23 : vector<8x32xf32>
    %25 = arith.truncf %24 : vector<8x32xf32> to vector<8x32xbf16>
    %c2 = arith.constant 2 : index
    %c0_18 = arith.constant 0 : index
    %c0_19 = arith.constant 0 : index
    %26 = vector.load %arg4[%c2, %c0_18, %c0_19] : memref<5x32x32xbf16, #tpu.memory_space<vmem>>, vector<1x32x32xbf16>
    %27 = vector.shape_cast %26 : vector<1x32x32xbf16> to vector<32x32xbf16>
    %cst_20 = arith.constant dense<0.000000e+00> : vector<8x32xf32>
    %28 = tpu.matmul %25, %27, %cst_20 {dimension_numbers = #tpu.dot_dimension_numbers<[1], [0], [0], [1], [0, 0, 1, 1], [], []>} : vector<8x32xbf16>, vector<32x32xbf16>, vector<8x32xf32> -> vector<8x32xf32>
    %c2_21 = arith.constant 2 : index
    %c0_22 = arith.constant 0 : index
    %c0_23 = arith.constant 0 : index
    %29 = vector.load %arg5[%c2_21, %c0_22, %c0_23] : memref<5x1x32xf32, #tpu.memory_space<vmem>>, vector<1x1x32xf32>
    %30 = vector.shape_cast %29 : vector<1x1x32xf32> to vector<1x32xf32>
    %31 = vector.broadcast %30 : vector<1x32xf32> to vector<8x32xf32>
    %32 = arith.addf %28, %31 : vector<8x32xf32>
    %33 = math.tanh %32 : vector<8x32xf32>
    %34 = arith.truncf %33 : vector<8x32xf32> to vector<8x32xbf16>
    %c3 = arith.constant 3 : index
    %c0_24 = arith.constant 0 : index
    %c0_25 = arith.constant 0 : index
    %35 = vector.load %arg4[%c3, %c0_24, %c0_25] : memref<5x32x32xbf16, #tpu.memory_space<vmem>>, vector<1x32x32xbf16>
    %36 = vector.shape_cast %35 : vector<1x32x32xbf16> to vector<32x32xbf16>
    %cst_26 = arith.constant dense<0.000000e+00> : vector<8x32xf32>
    %37 = tpu.matmul %34, %36, %cst_26 {dimension_numbers = #tpu.dot_dimension_numbers<[1], [0], [0], [1], [0, 0, 1, 1], [], []>} : vector<8x32xbf16>, vector<32x32xbf16>, vector<8x32xf32> -> vector<8x32xf32>
    %c3_27 = arith.constant 3 : index
    %c0_28 = arith.constant 0 : index
    %c0_29 = arith.constant 0 : index
    %38 = vector.load %arg5[%c3_27, %c0_28, %c0_29] : memref<5x1x32xf32, #tpu.memory_space<vmem>>, vector<1x1x32xf32>
    %39 = vector.shape_cast %38 : vector<1x1x32xf32> to vector<1x32xf32>
    %40 = vector.broadcast %39 : vector<1x32xf32> to vector<8x32xf32>
    %41 = arith.addf %37, %40 : vector<8x32xf32>
    %42 = math.tanh %41 : vector<8x32xf32>
    %43 = arith.truncf %42 : vector<8x32xf32> to vector<8x32xbf16>
    %c4 = arith.constant 4 : index
    %c0_30 = arith.constant 0 : index
    %c0_31 = arith.constant 0 : index
    %44 = vector.load %arg4[%c4, %c0_30, %c0_31] : memref<5x32x32xbf16, #tpu.memory_space<vmem>>, vector<1x32x32xbf16>
    %45 = vector.shape_cast %44 : vector<1x32x32xbf16> to vector<32x32xbf16>
    %cst_32 = arith.constant dense<0.000000e+00> : vector<8x32xf32>
    %46 = tpu.matmul %43, %45, %cst_32 {dimension_numbers = #tpu.dot_dimension_numbers<[1], [0], [0], [1], [0, 0, 1, 1], [], []>} : vector<8x32xbf16>, vector<32x32xbf16>, vector<8x32xf32> -> vector<8x32xf32>
    %c4_33 = arith.constant 4 : index
    %c0_34 = arith.constant 0 : index
    %c0_35 = arith.constant 0 : index
    %47 = vector.load %arg5[%c4_33, %c0_34, %c0_35] : memref<5x1x32xf32, #tpu.memory_space<vmem>>, vector<1x1x32xf32>
    %48 = vector.shape_cast %47 : vector<1x1x32xf32> to vector<1x32xf32>
    %49 = vector.broadcast %48 : vector<1x32xf32> to vector<8x32xf32>
    %50 = arith.addf %46, %49 : vector<8x32xf32>
    %51 = math.tanh %50 : vector<8x32xf32>
    %52 = arith.truncf %51 : vector<8x32xf32> to vector<8x32xbf16>
    %53 = arith.truncf %42 : vector<8x32xf32> to vector<8x32xbf16>
    %c0_36 = arith.constant 0 : index
    %c0_37 = arith.constant 0 : index
    %54 = vector.load %arg7[%c0_36, %c0_37] : memref<32x64xbf16, #tpu.memory_space<vmem>>, vector<32x64xbf16>
    %cst_38 = arith.constant dense<0.000000e+00> : vector<8x64xf32>
    %55 = tpu.matmul %53, %54, %cst_38 {dimension_numbers = #tpu.dot_dimension_numbers<[1], [0], [0], [1], [0, 0, 1, 1], [], []>} : vector<8x32xbf16>, vector<32x64xbf16>, vector<8x64xf32> -> vector<8x64xf32>
    %c0_39 = arith.constant 0 : index
    %c0_40 = arith.constant 0 : index
    %56 = vector.load %arg8[%c0_39, %c0_40] : memref<1x64xf32, #tpu.memory_space<vmem>>, vector<1x64xf32>
    %57 = vector.broadcast %56 : vector<1x64xf32> to vector<8x64xf32>
    %58 = arith.addf %55, %57 : vector<8x64xf32>
    %c0_41 = arith.constant 0 : index
    %c0_42 = arith.constant 0 : index
    %59 = vector.load %arg9[%c0_41, %c0_42] : memref<32x64xbf16, #tpu.memory_space<vmem>>, vector<32x64xbf16>
    %cst_43 = arith.constant dense<0.000000e+00> : vector<8x64xf32>
    %60 = tpu.matmul %53, %59, %cst_43 {dimension_numbers = #tpu.dot_dimension_numbers<[1], [0], [0], [1], [0, 0, 1, 1], [], []>} : vector<8x32xbf16>, vector<32x64xbf16>, vector<8x64xf32> -> vector<8x64xf32>
    %c0_44 = arith.constant 0 : index
    %c0_45 = arith.constant 0 : index
    %61 = vector.load %arg10[%c0_44, %c0_45] : memref<1x64xf32, #tpu.memory_space<vmem>>, vector<1x64xf32>
    %62 = vector.broadcast %61 : vector<1x64xf32> to vector<8x64xf32>
    %63 = arith.addf %60, %62 : vector<8x64xf32>
    %c0_46 = arith.constant 0 : index
    %c0_47 = arith.constant 0 : index
    %64 = vector.load %arg6[%c0_46, %c0_47] : memref<32x128xbf16, #tpu.memory_space<vmem>>, vector<32x128xbf16>
    %cst_48 = arith.constant dense<0.000000e+00> : vector<8x128xf32>
    %65 = tpu.matmul %52, %64, %cst_48 {dimension_numbers = #tpu.dot_dimension_numbers<[1], [0], [0], [1], [0, 0, 1, 1], [], []>} : vector<8x32xbf16>, vector<32x128xbf16>, vector<8x128xf32> -> vector<8x128xf32>
    %66 = arith.truncf %58 : vector<8x64xf32> to vector<8x64xbf16>
    %c0_49 = arith.constant 0 : index
    %c0_50 = arith.constant 0 : index
    %67 = vector.load %arg11[%c0_49, %c0_50] : memref<64x128xbf16, #tpu.memory_space<vmem>>, vector<64x128xbf16>
    %cst_51 = arith.constant dense<0.000000e+00> : vector<8x128xf32>
    %68 = tpu.matmul %66, %67, %cst_51 {dimension_numbers = #tpu.dot_dimension_numbers<[1], [0], [0], [1], [0, 0, 1, 1], [], []>} : vector<8x64xbf16>, vector<64x128xbf16>, vector<8x128xf32> -> vector<8x128xf32>
    %69 = arith.addf %65, %68 : vector<8x128xf32>
    %70 = arith.truncf %63 : vector<8x64xf32> to vector<8x64xbf16>
    %c0_52 = arith.constant 0 : index
    %c0_53 = arith.constant 0 : index
    %71 = vector.load %arg12[%c0_52, %c0_53] : memref<64x128xbf16, #tpu.memory_space<vmem>>, vector<64x128xbf16>
    %cst_54 = arith.constant dense<0.000000e+00> : vector<8x128xf32>
    %72 = tpu.matmul %70, %71, %cst_54 {dimension_numbers = #tpu.dot_dimension_numbers<[1], [0], [0], [1], [0, 0, 1, 1], [], []>} : vector<8x64xbf16>, vector<64x128xbf16>, vector<8x128xf32> -> vector<8x128xf32>
    %73 = arith.addf %69, %72 : vector<8x128xf32>
    %c0_55 = arith.constant 0 : index
    %c0_56 = arith.constant 0 : index
    %74 = vector.load %arg13[%c0_55, %c0_56] : memref<1x128xf32, #tpu.memory_space<vmem>>, vector<1x128xf32>
    %75 = vector.broadcast %74 : vector<1x128xf32> to vector<8x128xf32>
    %76 = arith.addf %73, %75 : vector<8x128xf32>
    %c0_57 = arith.constant 0 : index
    %c0_58 = arith.constant 0 : index
    %77 = vector.load %arg14[%c0_57, %c0_58] : memref<8x128xf32, #tpu.memory_space<vmem>>, vector<8x128xf32>
    tpu.vector_store %arg14[%c0_57, %c0_58], %76 {strides = array<i32>} : memref<8x128xf32, #tpu.memory_space<vmem>>, vector<8x128xf32>,
    return
  }
  func.func @transform_0(%arg0: i32) -> (i32, i32) {
    %c0_i32 = arith.constant 0 : i32
    %c0_i32_0 = arith.constant 0 : i32
    return %arg0, %c0_i32 : i32, i32
  }
  func.func @transform_1(%arg0: i32) -> (i32, i32) {
    %c0_i32 = arith.constant 0 : i32
    %c0_i32_0 = arith.constant 0 : i32
    %c0_i32_1 = arith.constant 0 : i32
    return %c0_i32, %c0_i32_0 : i32, i32
  }
  func.func @transform_2(%arg0: i32) -> (i32, i32) {
    %c0_i32 = arith.constant 0 : i32
    %c0_i32_0 = arith.constant 0 : i32
    %c0_i32_1 = arith.constant 0 : i32
    return %c0_i32, %c0_i32_0 : i32, i32
  }
  func.func @transform_3(%arg0: i32) -> (i32, i32, i32) {
    %c0_i32 = arith.constant 0 : i32
    %c0_i32_0 = arith.constant 0 : i32
    %c0_i32_1 = arith.constant 0 : i32
    %c0_i32_2 = arith.constant 0 : i32
    return %c0_i32, %c0_i32_0, %c0_i32_1 : i32, i32, i32
  }
  func.func @transform_4(%arg0: i32) -> (i32, i32, i32) {
    %c0_i32 = arith.constant 0 : i32
    %c0_i32_0 = arith.constant 0 : i32
    %c0_i32_1 = arith.constant 0 : i32
    %c0_i32_2 = arith.constant 0 : i32
    return %c0_i32, %c0_i32_0, %c0_i32_1 : i32, i32, i32
  }
  func.func @transform_5(%arg0: i32) -> (i32, i32) {
    %c0_i32 = arith.constant 0 : i32
    %c0_i32_0 = arith.constant 0 : i32
    %c0_i32_1 = arith.constant 0 : i32
    return %c0_i32, %c0_i32_0 : i32, i32
  }
  func.func @transform_6(%arg0: i32) -> (i32, i32) {
    %c0_i32 = arith.constant 0 : i32
    %c0_i32_0 = arith.constant 0 : i32
    %c0_i32_1 = arith.constant 0 : i32
    return %c0_i32, %c0_i32_0 : i32, i32
  }
  func.func @transform_7(%arg0: i32) -> (i32, i32) {
    %c0_i32 = arith.constant 0 : i32
    %c0_i32_0 = arith.constant 0 : i32
    %c0_i32_1 = arith.constant 0 : i32
    return %c0_i32, %c0_i32_0 : i32, i32
  }
  func.func @transform_8(%arg0: i32) -> (i32, i32) {
    %c0_i32 = arith.constant 0 : i32
    %c0_i32_0 = arith.constant 0 : i32
    %c0_i32_1 = arith.constant 0 : i32
    return %c0_i32, %c0_i32_0 : i32, i32
  }
  func.func @transform_9(%arg0: i32) -> (i32, i32) {
    %c0_i32 = arith.constant 0 : i32
    %c0_i32_0 = arith.constant 0 : i32
    %c0_i32_1 = arith.constant 0 : i32
    return %c0_i32, %c0_i32_0 : i32, i32
  }
  func.func @transform_10(%arg0: i32) -> (i32, i32) {
    %c0_i32 = arith.constant 0 : i32
    %c0_i32_0 = arith.constant 0 : i32
    %c0_i32_1 = arith.constant 0 : i32
    return %c0_i32, %c0_i32_0 : i32, i32
  }
  func.func @transform_11(%arg0: i32) -> (i32, i32) {
    %c0_i32 = arith.constant 0 : i32
    %c0_i32_0 = arith.constant 0 : i32
    %c0_i32_1 = arith.constant 0 : i32
    return %c0_i32, %c0_i32_0 : i32, i32
  }
  func.func @transform_12(%arg0: i32) -> (i32, i32) {
    %c0_i32 = arith.constant 0 : i32
    %c0_i32_0 = arith.constant 0 : i32
    %c0_i32_1 = arith.constant 0 : i32
    return %c0_i32, %c0_i32_0 : i32, i32
  }
  func.func @transform_13(%arg0: i32) -> (i32, i32) {
    %c0_i32 = arith.constant 0 : i32
    %c0_i32_0 = arith.constant 0 : i32
    return %arg0, %c0_i32 : i32, i32
  }
}

</mosaic_0001>

<llo_original>
// kernel: wav2all_forward.1
$region0: #{wav2all_forward.1}
  #allocation0 [shape = 'u32[]', space=smem, size = 0x4, offset = 0x4, fixed_abs, tag = 'smem constant byte address 0x4 - core index']
  #allocation1 [shape = 'u32[144,128]{1,0:T(1,128)}', space=vmem, size = 0x12000, scoped, tag = 'internal scratch']
  %s0 = inlined_call_operand.vmem [shape: bf16[16,40], index: 0, kind: input, shape index: {}]
  %s1 = inlined_call_operand.vmem [shape: bf16[40,32], index: 1, kind: input, shape index: {}]
  %s2 = inlined_call_operand.hbm [shape: f32[1,32], index: 2, kind: input, shape index: {}]
  %s3 = inlined_call_operand.vmem [shape: bf16[5,32,32], index: 3, kind: input, shape index: {}]
  %s4 = inlined_call_operand.hbm [shape: f32[5,1,32], index: 4, kind: input, shape index: {}]
  %s5 = inlined_call_operand.vmem [shape: bf16[32,128], index: 5, kind: input, shape index: {}]
  %s6 = inlined_call_operand.vmem [shape: bf16[32,64], index: 6, kind: input, shape index: {}]
  %s7 = inlined_call_operand.vmem [shape: f32[1,64], index: 7, kind: input, shape index: {}]
  %s8 = inlined_call_operand.vmem [shape: bf16[32,64], index: 8, kind: input, shape index: {}]
  %s9 = inlined_call_operand.vmem [shape: f32[1,64], index: 9, kind: input, shape index: {}]
  %s10 = inlined_call_operand.vmem [shape: bf16[64,128], index: 10, kind: input, shape index: {}]
  %s11 = inlined_call_operand.vmem [shape: bf16[64,128], index: 11, kind: input, shape index: {}]
  %s12 = inlined_call_operand.hbm [shape: f32[1,128], index: 12, kind: input, shape index: {}]
  %s13 = inlined_call_operand.vmem [shape: f32[16,128], index: 13, kind: output, shape index: {}]
  %s14 = sld [smem:[#allocation0]]
  $region97: #{wav2all_forward.1} parent=0
    _
  %s16 = ssub.s32 1, %s14
  %s17 = scalar_select 0, %s16, %s14
  $region1: #{wav2all_forward.1} parent=0
    #allocation2 [shape = 'u8[512]{0}', space=vmem, size = 0x400, scoped, tag = 'input window, operand 2, single buffered']
    #allocation3 [shape = 's32[2]{0}', space=sflag, size = 0x8, scoped, tag = 'scoped memory for wav2all_forward.1']
    #allocation4 [shape = 'u8[2560]{0}', space=vmem, size = 0xc00, scoped, tag = 'input window, operand 4, single buffered']
    #allocation5 [shape = 's32[1]{0}', space=sflag, size = 0x4, scoped, tag = 'scoped memory for wav2all_forward.1']
    #allocation6 [shape = 'u8[512]{0}', space=vmem, size = 0x400, scoped, tag = 'input window, operand 12, single buffered']
    %18 = vsyncpa [#allocation3], 0
    %19 = vsyncpa [#allocation5], 0
    loop: start=0, step=1, limit=4
    $region2: #{wav2all_forward.1} parent=1 // loop_pre_header
      _
    $region3: #{wav2all_forward.1} parent=1 // loop_header
      %s21 = sphi 0, %s25
      %p22 = scmp.ge.s32.totalorder %s21, 4
      %s31 = sphi 0, %s33
      %s34 = sphi 0, %s31
      %s35 = sphi 0, %s34
      %s51 = sphi 0, %s35
      %s55 = sphi 0, %s55
      %s57 = sphi 0, %s55
      %s58 = sphi 0, %s57
      %s72 = sphi 0, %s58
      %s76 = sphi 0, %s76
      %s78 = sphi 0, %s76
      %s79 = sphi 0, %s78
      %s93 = sphi 0, %s79
      %s97 = sphi 0, %s97
      %s99 = sphi 0, %s97
      %s100 = sphi 0, %s99
      %s114 = sphi 0, %s100
      %s118 = sphi 0, %s118
      %s120 = sphi 0, %s118
      %s121 = sphi 0, %s120
      %s135 = sphi 0, %s121
      %s139 = sphi 0, %s139
      %s141 = sphi 0, %s139
      %s142 = sphi 0, %s141
      %s156 = sphi 0, %s142
      %s160 = sphi 0, %s160
      %s162 = sphi 0, %s160
      %s163 = sphi 0, %s162
      %s177 = sphi 0, %s163
      %s181 = sphi 0, %s181
      %s183 = sphi 0, %s181
      %s184 = sphi 0, %s183
      %s198 = sphi 0, %s184
      %s202 = sphi 0, %s202
      %s204 = sphi 0, %s202
      %s205 = sphi 0, %s204
      %s219 = sphi 0, %s205
      %s223 = sphi 0, %s223
      %s225 = sphi 0, %s223
      %s226 = sphi 0, %s225
      %s240 = sphi 0, %s226
      %s244 = sphi 0, %s244
      %s246 = sphi 0, %s244
      %s247 = sphi 0, %s246
      %s261 = sphi 0, %s247
      %s265 = sphi 0, %s265
      %s267 = sphi 0, %s265
      %s268 = sphi 0, %s267
      %s282 = sphi 0, %s268
      %s286 = sphi 0, %s286
      %s288 = sphi 0, %s286
      %s289 = sphi 0, %s288
      %s303 = sphi 0, %s289
      %s309 = sphi 0, %s311
      %s312 = sphi 0, %s309
      %s313 = sphi 0, %s312
      %s329 = sphi 0, %s313
    $region4: #{wav2all_forward.1} parent=1 // loop_header_branch
      %24 = sbr.rel (%p22) target = $region8
    $region5: #{wav2all_forward.1} parent=1 // loop_body
      %s26 = ssub.s32 %s21, 1
      %s27 = ssub.s32 %s21, 2
      %s28 = sadd.s32 %s21, 1
      %s29 = ssub.s32 %s21, %s28
      %p30 = scmp.eq.s32.totalorder %s29, 0
      %s32 = sadd.s32 %s31, 1
      %s33 = scalar_select %p30, %s31, %s32
      %p36 = pneg %p30
      %p37 = scmp.eq.s32.totalorder %s21, 1
      %p38 = por %p36, %p37
      %p39 = scmp.ne.s32.totalorder %s31, %s34
      %p40 = scmp.eq.s32.totalorder %s21, 0
      %p41 = por %p39, %p40
      %p42 = scmp.ne.s32.totalorder %s31, %s34
      %p43 = scmp.eq.s32.totalorder %s26, 1
      %p44 = por %p42, %p43
      %p45 = scmp.ne.s32.totalorder %s34, %s35
      %p46 = scmp.eq.s32.totalorder %s26, 0
      %p47 = por %p45, %p46
      %p48 = scmp.ne.s32.totalorder %s34, %s35
      %p49 = scmp.eq.s32.totalorder %s27, 1
      %p50 = por %p48, %p49
      %p52 = scmp.ne.s32.totalorder %s35, %s51
      %p53 = scmp.eq.s32.totalorder %s27, 0
      %p54 = por %p52, %p53
      %s56 = sadd.s32 %s55, 1
      %p59 = scmp.eq.s32.totalorder %s21, 1
      %p60 = scmp.ne.s32.totalorder %s55, %s57
      %p61 = scmp.eq.s32.totalorder %s21, 0
      %p62 = por %p60, %p61
      %p63 = scmp.ne.s32.totalorder %s55, %s57
      %p64 = scmp.eq.s32.totalorder %s26, 1
      %p65 = por %p63, %p64
      %p66 = scmp.ne.s32.totalorder %s57, %s58
      %p67 = scmp.eq.s32.totalorder %s26, 0
      %p68 = por %p66, %p67
      %p69 = scmp.ne.s32.totalorder %s57, %s58
      %p70 = scmp.eq.s32.totalorder %s27, 1
      %p71 = por %p69, %p70
      %p73 = scmp.ne.s32.totalorder %s58, %s72
      %p74 = scmp.eq.s32.totalorder %s27, 0
      %p75 = por %p73, %p74
      %s77 = sadd.s32 %s76, 1
      %p80 = scmp.eq.s32.totalorder %s21, 1
      %p81 = scmp.ne.s32.totalorder %s76, %s78
      %p82 = scmp.eq.s32.totalorder %s21, 0
      %p83 = por %p81, %p82
      %p84 = scmp.ne.s32.totalorder %s76, %s78
      %p85 = scmp.eq.s32.totalorder %s26, 1
      %p86 = por %p84, %p85
      %p87 = scmp.ne.s32.totalorder %s78, %s79
      %p88 = scmp.eq.s32.totalorder %s26, 0
      %p89 = por %p87, %p88
      %p90 = scmp.ne.s32.totalorder %s78, %s79
      %p91 = scmp.eq.s32.totalorder %s27, 1
      %p92 = por %p90, %p91
      %p94 = scmp.ne.s32.totalorder %s79, %s93
      %p95 = scmp.eq.s32.totalorder %s27, 0
      %p96 = por %p94, %p95
      %s98 = sadd.s32 %s97, 1
      %p101 = scmp.eq.s32.totalorder %s21, 1
      %p102 = scmp.ne.s32.totalorder %s97, %s99
      %p103 = scmp.eq.s32.totalorder %s21, 0
      %p104 = por %p102, %p103
      %p105 = scmp.ne.s32.totalorder %s97, %s99
      %p106 = scmp.eq.s32.totalorder %s26, 1
      %p107 = por %p105, %p106
      %p108 = scmp.ne.s32.totalorder %s99, %s100
      %p109 = scmp.eq.s32.totalorder %s26, 0
      %p110 = por %p108, %p109
      %p111 = scmp.ne.s32.totalorder %s99, %s100
      %p112 = scmp.eq.s32.totalorder %s27, 1
      %p113 = por %p111, %p112
      %p115 = scmp.ne.s32.totalorder %s100, %s114
      %p116 = scmp.eq.s32.totalorder %s27, 0
      %p117 = por %p115, %p116
      %s119 = sadd.s32 %s118, 1
      %p122 = scmp.eq.s32.totalorder %s21, 1
      %p123 = scmp.ne.s32.totalorder %s118, %s120
      %p124 = scmp.eq.s32.totalorder %s21, 0
      %p125 = por %p123, %p124
      %p126 = scmp.ne.s32.totalorder %s118, %s120
      %p127 = scmp.eq.s32.totalorder %s26, 1
      %p128 = por %p126, %p127
      %p129 = scmp.ne.s32.totalorder %s120, %s121
      %p130 = scmp.eq.s32.totalorder %s26, 0
      %p131 = por %p129, %p130
      %p132 = scmp.ne.s32.totalorder %s120, %s121
      %p133 = scmp.eq.s32.totalorder %s27, 1
      %p134 = por %p132, %p133
      %p136 = scmp.ne.s32.totalorder %s121, %s135
      %p137 = scmp.eq.s32.totalorder %s27, 0
      %p138 = por %p136, %p137
      %s140 = sadd.s32 %s139, 1
      %p143 = scmp.eq.s32.totalorder %s21, 1
      %p144 = scmp.ne.s32.totalorder %s139, %s141
      %p145 = scmp.eq.s32.totalorder %s21, 0
      %p146 = por %p144, %p145
      %p147 = scmp.ne.s32.totalorder %s139, %s141
      %p148 = scmp.eq.s32.totalorder %s26, 1
      %p149 = por %p147, %p148
      %p150 = scmp.ne.s32.totalorder %s141, %s142
      %p151 = scmp.eq.s32.totalorder %s26, 0
      %p152 = por %p150, %p151
      %p153 = scmp.ne.s32.totalorder %s141, %s142
      %p154 = scmp.eq.s32.totalorder %s27, 1
      %p155 = por %p153, %p154
      %p157 = scmp.ne.s32.totalorder %s142, %s156
      %p158 = scmp.eq.s32.totalorder %s27, 0
      %p159 = por %p157, %p158
      %s161 = sadd.s32 %s160, 1
      %p164 = scmp.eq.s32.totalorder %s21, 1
      %p165 = scmp.ne.s32.totalorder %s160, %s162
      %p166 = scmp.eq.s32.totalorder %s21, 0
      %p167 = por %p165, %p166
      %p168 = scmp.ne.s32.totalorder %s160, %s162
      %p169 = scmp.eq.s32.totalorder %s26, 1
      %p170 = por %p168, %p169
      %p171 = scmp.ne.s32.totalorder %s162, %s163
      %p172 = scmp.eq.s32.totalorder %s26, 0
      %p173 = por %p171, %p172
      %p174 = scmp.ne.s32.totalorder %s162, %s163
      %p175 = scmp.eq.s32.totalorder %s27, 1
      %p176 = por %p174, %p175
      %p178 = scmp.ne.s32.totalorder %s163, %s177
      %p179 = scmp.eq.s32.totalorder %s27, 0
      %p180 = por %p178, %p179
      %s182 = sadd.s32 %s181, 1
      %p185 = scmp.eq.s32.totalorder %s21, 1
      %p186 = scmp.ne.s32.totalorder %s181, %s183
      %p187 = scmp.eq.s32.totalorder %s21, 0
      %p188 = por %p186, %p187
      %p189 = scmp.ne.s32.totalorder %s181, %s183
      %p190 = scmp.eq.s32.totalorder %s26, 1
      %p191 = por %p189, %p190
      %p192 = scmp.ne.s32.totalorder %s183, %s184
      %p193 = scmp.eq.s32.totalorder %s26, 0
      %p194 = por %p192, %p193
      %p195 = scmp.ne.s32.totalorder %s183, %s184
      %p196 = scmp.eq.s32.totalorder %s27, 1
      %p197 = por %p195, %p196
      %p199 = scmp.ne.s32.totalorder %s184, %s198
      %p200 = scmp.eq.s32.totalorder %s27, 0
      %p201 = por %p199, %p200
      %s203 = sadd.s32 %s202, 1
      %p206 = scmp.eq.s32.totalorder %s21, 1
      %p207 = scmp.ne.s32.totalorder %s202, %s204
      %p208 = scmp.eq.s32.totalorder %s21, 0
      %p209 = por %p207, %p208
      %p210 = scmp.ne.s32.totalorder %s202, %s204
      %p211 = scmp.eq.s32.totalorder %s26, 1
      %p212 = por %p210, %p211
      %p213 = scmp.ne.s32.totalorder %s204, %s205
      %p214 = scmp.eq.s32.totalorder %s26, 0
      %p215 = por %p213, %p214
      %p216 = scmp.ne.s32.totalorder %s204, %s205
      %p217 = scmp.eq.s32.totalorder %s27, 1
      %p218 = por %p216, %p217
      %p220 = scmp.ne.s32.totalorder %s205, %s219
      %p221 = scmp.eq.s32.totalorder %s27, 0
      %p222 = por %p220, %p221
      %s224 = sadd.s32 %s223, 1
      %p227 = scmp.eq.s32.totalorder %s21, 1
      %p228 = scmp.ne.s32.totalorder %s223, %s225
      %p229 = scmp.eq.s32.totalorder %s21, 0
      %p230 = por %p228, %p229
      %p231 = scmp.ne.s32.totalorder %s223, %s225
      %p232 = scmp.eq.s32.totalorder %s26, 1
      %p233 = por %p231, %p232
      %p234 = scmp.ne.s32.totalorder %s225, %s226
      %p235 = scmp.eq.s32.totalorder %s26, 0
      %p236 = por %p234, %p235
      %p237 = scmp.ne.s32.totalorder %s225, %s226
      %p238 = scmp.eq.s32.totalorder %s27, 1
      %p239 = por %p237, %p238
      %p241 = scmp.ne.s32.totalorder %s226, %s240
      %p242 = scmp.eq.s32.totalorder %s27, 0
      %p243 = por %p241, %p242
      %s245 = sadd.s32 %s244, 1
      %p248 = scmp.eq.s32.totalorder %s21, 1
      %p249 = scmp.ne.s32.totalorder %s244, %s246
      %p250 = scmp.eq.s32.totalorder %s21, 0
      %p251 = por %p249, %p250
      %p252 = scmp.ne.s32.totalorder %s244, %s246
      %p253 = scmp.eq.s32.totalorder %s26, 1
      %p254 = por %p252, %p253
      %p255 = scmp.ne.s32.totalorder %s246, %s247
      %p256 = scmp.eq.s32.totalorder %s26, 0
      %p257 = por %p255, %p256
      %p258 = scmp.ne.s32.totalorder %s246, %s247
      %p259 = scmp.eq.s32.totalorder %s27, 1
      %p260 = por %p258, %p259
      %p262 = scmp.ne.s32.totalorder %s247, %s261
      %p263 = scmp.eq.s32.totalorder %s27, 0
      %p264 = por %p262, %p263
      %s266 = sadd.s32 %s265, 1
      %p269 = scmp.eq.s32.totalorder %s21, 1
      %p270 = scmp.ne.s32.totalorder %s265, %s267
      %p271 = scmp.eq.s32.totalorder %s21, 0
      %p272 = por %p270, %p271
      %p273 = scmp.ne.s32.totalorder %s265, %s267
      %p274 = scmp.eq.s32.totalorder %s26, 1
      %p275 = por %p273, %p274
      %p276 = scmp.ne.s32.totalorder %s267, %s268
      %p277 = scmp.eq.s32.totalorder %s26, 0
      %p278 = por %p276, %p277
      %p279 = scmp.ne.s32.totalorder %s267, %s268
      %p280 = scmp.eq.s32.totalorder %s27, 1
      %p281 = por %p279, %p280
      %p283 = scmp.ne.s32.totalorder %s268, %s282
      %p284 = scmp.eq.s32.totalorder %s27, 0
      %p285 = por %p283, %p284
      %s287 = sadd.s32 %s286, 1
      %p290 = scmp.eq.s32.totalorder %s21, 1
      %p291 = scmp.ne.s32.totalorder %s286, %s288
      %p292 = scmp.eq.s32.totalorder %s21, 0
      %p293 = por %p291, %p292
      %p294 = scmp.ne.s32.totalorder %s286, %s288
      %p295 = scmp.eq.s32.totalorder %s26, 1
      %p296 = por %p294, %p295
      %p297 = scmp.ne.s32.totalorder %s288, %s289
      %p298 = scmp.eq.s32.totalorder %s26, 0
      %p299 = por %p297, %p298
      %p300 = scmp.ne.s32.totalorder %s288, %s289
      %p301 = scmp.eq.s32.totalorder %s27, 1
      %p302 = por %p300, %p301
      %p304 = scmp.ne.s32.totalorder %s289, %s303
      %p305 = scmp.eq.s32.totalorder %s27, 0
      %p306 = por %p304, %p305
      %s307 = ssub.s32 %s21, %s28
      %p308 = scmp.eq.s32.totalorder %s307, 0
      %s310 = sadd.s32 %s309, 1
      %s311 = scalar_select %p308, %s309, %s310
      %p314 = pneg %p308
      %p315 = scmp.eq.s32.totalorder %s21, 1
      %p316 = por %p314, %p315
      %p317 = scmp.ne.s32.totalorder %s309, %s312
      %p318 = scmp.eq.s32.totalorder %s21, 0
      %p319 = por %p317, %p318
      %p320 = scmp.ne.s32.totalorder %s309, %s312
      %p321 = scmp.eq.s32.totalorder %s26, 1
      %p322 = por %p320, %p321
      %p323 = scmp.ne.s32.totalorder %s312, %s313
      %p324 = scmp.eq.s32.totalorder %s26, 0
      %p325 = por %p323, %p324
      %p326 = scmp.ne.s32.totalorder %s312, %s313
      %p327 = scmp.eq.s32.totalorder %s27, 1
      %p328 = por %p326, %p327
      %p330 = scmp.ne.s32.totalorder %s313, %s329
      %p331 = scmp.eq.s32.totalorder %s27, 0
      %p332 = por %p330, %p331
      %p333 = scmp.le.s32.totalorder 1, %s21
      %p334 = scmp.lt.s32.totalorder %s21, 3
      %p335 = pnand %p333, %p334
      %p336 = pneg %p335
      // Predicated region
      $region9: #{wav2all_forward.1} parent=5 // pred_check
        _
      $region10: #{wav2all_forward.1} parent=5 // pred_check_branch
        %338 = sbr.rel (%p335) target = $region12
      $region11: #{wav2all_forward.1} parent=5 // pred_region
        %s339 = ssub.s32 %s21, 1
        // Predicated region
        $region13: #{wav2all_forward.1} parent=11 // pred_check
          %p340 = pneg %p68
        $region14: #{wav2all_forward.1} parent=11 // pred_check_branch
          %342 = sbr.rel (%p340) target = $region16
        $region15: #{wav2all_forward.1} parent=11 // pred_region
          _
        $region16: #{wav2all_forward.1} parent=11 // pred_fallthru
          _
        // Predicated region
        $region17: #{wav2all_forward.1} parent=11 // pred_check
          %p343 = pneg %p89
        $region18: #{wav2all_forward.1} parent=11 // pred_check_branch
          %345 = sbr.rel (%p343) target = $region20
        $region19: #{wav2all_forward.1} parent=11 // pred_region
          %s347 = ssub.s32 16, 16
          %348 = vsyncadd [#allocation3], %s347
          %s350 = sshll.u32 [#allocation2], 4
          %s351 = int_to_ptr.vmem [resolvable:$true] %s350
          %353 = dma.hbm_to_vmem [thread:$0]  %s2, 16, %s351, [#allocation3]
        $region20: #{wav2all_forward.1} parent=11 // pred_fallthru
          _
        // Predicated region
        $region21: #{wav2all_forward.1} parent=11 // pred_check
          %p354 = pneg %p110
        $region22: #{wav2all_forward.1} parent=11 // pred_check_branch
          %356 = sbr.rel (%p354) target = $region24
        $region23: #{wav2all_forward.1} parent=11 // pred_region
          _
        $region24: #{wav2all_forward.1} parent=11 // pred_fallthru
          _
        // Predicated region
        $region25: #{wav2all_forward.1} parent=11 // pred_check
          %p357 = pneg %p131
        $region26: #{wav2all_forward.1} parent=11 // pred_check_branch
          %359 = sbr.rel (%p357) target = $region28
        $region27: #{wav2all_forward.1} parent=11 // pred_region
          %s361 = ssub.s32 80, 80
          %362 = vsyncadd [#allocation5], %s361
          %s363 = sshll.u32 [#allocation4], 4
          %s364 = int_to_ptr.vmem [resolvable:$true] %s363
          %369 = dma.hbm_to_vmem [thread:$0]  %s4, 80, %s364, [#allocation5], 16, 16, 1
        $region28: #{wav2all_forward.1} parent=11 // pred_fallthru
          _
        // Predicated region
        $region29: #{wav2all_forward.1} parent=11 // pred_check
          %p370 = pneg %p152
        $region30: #{wav2all_forward.1} parent=11 // pred_check_branch
          %372 = sbr.rel (%p370) target = $region32
        $region31: #{wav2all_forward.1} parent=11 // pred_region
          _
        $region32: #{wav2all_forward.1} parent=11 // pred_fallthru
          _
        // Predicated region
        $region33: #{wav2all_forward.1} parent=11 // pred_check
          %p373 = pneg %p173
        $region34: #{wav2all_forward.1} parent=11 // pred_check_branch
          %375 = sbr.rel (%p373) target = $region36
        $region35: #{wav2all_forward.1} parent=11 // pred_region
          _
        $region36: #{wav2all_forward.1} parent=11 // pred_fallthru
          _
        // Predicated region
        $region37: #{wav2all_forward.1} parent=11 // pred_check
          %p376 = pneg %p194
        $region38: #{wav2all_forward.1} parent=11 // pred_check_branch
          %378 = sbr.rel (%p376) target = $region40
        $region39: #{wav2all_forward.1} parent=11 // pred_region
          _
        $region40: #{wav2all_forward.1} parent=11 // pred_fallthru
          _
        // Predicated region
        $region41: #{wav2all_forward.1} parent=11 // pred_check
          %p379 = pneg %p215
        $region42: #{wav2all_forward.1} parent=11 // pred_check_branch
          %381 = sbr.rel (%p379) target = $region44
        $region43: #{wav2all_forward.1} parent=11 // pred_region
          _
        $region44: #{wav2all_forward.1} parent=11 // pred_fallthru
          _
        // Predicated region
        $region45: #{wav2all_forward.1} parent=11 // pred_check
          %p382 = pneg %p236
        $region46: #{wav2all_forward.1} parent=11 // pred_check_branch
          %384 = sbr.rel (%p382) target = $region48
        $region47: #{wav2all_forward.1} parent=11 // pred_region
          _
        $region48: #{wav2all_forward.1} parent=11 // pred_fallthru
          _
        // Predicated region
        $region49: #{wav2all_forward.1} parent=11 // pred_check
          %p385 = pneg %p257
        $region50: #{wav2all_forward.1} parent=11 // pred_check_branch
          %387 = sbr.rel (%p385) target = $region52
        $region51: #{wav2all_forward.1} parent=11 // pred_region
          _
        $region52: #{wav2all_forward.1} parent=11 // pred_fallthru
          _
        // Predicated region
        $region53: #{wav2all_forward.1} parent=11 // pred_check
          %p388 = pneg %p278
        $region54: #{wav2all_forward.1} parent=11 // pred_check_branch
          %390 = sbr.rel (%p388) target = $region56
        $region55: #{wav2all_forward.1} parent=11 // pred_region
          _
        $region56: #{wav2all_forward.1} parent=11 // pred_fallthru
          _
        // Predicated region
        $region57: #{wav2all_forward.1} parent=11 // pred_check
          %p391 = pneg %p299
        $region58: #{wav2all_forward.1} parent=11 // pred_check_branch
          %393 = sbr.rel (%p391) target = $region60
        $region59: #{wav2all_forward.1} parent=11 // pred_region
          %s395 = ssub.s32 16, 16
          %396 = vsyncadd [#allocation5], %s395
          %s398 = sshll.u32 [#allocation6], 4
          %s399 = int_to_ptr.vmem [resolvable:$true] %s398
          %401 = dma.hbm_to_vmem [thread:$0]  %s12, 16, %s399, [#allocation5]
        $region60: #{wav2all_forward.1} parent=11 // pred_fallthru
          _
      $region12: #{wav2all_forward.1} parent=5 // pred_fallthru
        _
      %p402 = scmp.lt.s32.totalorder %s21, 2
      // Predicated region
      $region61: #{wav2all_forward.1} parent=5 // pred_check
        %p403 = pneg %p402
      $region62: #{wav2all_forward.1} parent=5 // pred_check_branch
        %405 = sbr.rel (%p403) target = $region64
      $region63: #{wav2all_forward.1} parent=5 // pred_region
        // Predicated region
        $region65: #{wav2all_forward.1} parent=63 // pred_check
          %p406 = pneg %p41
        $region66: #{wav2all_forward.1} parent=63 // pred_check_branch
          %408 = sbr.rel (%p406) target = $region68
        $region67: #{wav2all_forward.1} parent=63 // pred_region
          %p409 = scmp.lt.s32.totalorder %s21, 1
          %s410 = scalar_select %p409, %s21, 1
          %s411 = smul.addr %s410, 4
          %s412 = scalar_lea.vmem %s0, %s411
        $region68: #{wav2all_forward.1} parent=63 // pred_fallthru
          _
      $region64: #{wav2all_forward.1} parent=5 // pred_fallthru
        _
      %p413 = scmp.le.s32.totalorder 1, %s21
      %p414 = scmp.lt.s32.totalorder %s21, 3
      %p415 = pnand %p413, %p414
      %p416 = pneg %p415
      // Predicated region
      $region69: #{wav2all_forward.1} parent=5 // pred_check
        _
      $region70: #{wav2all_forward.1} parent=5 // pred_check_branch
        %418 = sbr.rel (%p415) target = $region72
      $region71: #{wav2all_forward.1} parent=5 // pred_region
        %s419 = ssub.s32 %s21, 1
        // Predicated region
        $region73: #{wav2all_forward.1} parent=71 // pred_check
          %p420 = pneg %p89
        $region74: #{wav2all_forward.1} parent=71 // pred_check_branch
          %422 = sbr.rel (%p420) target = $region76
        $region75: #{wav2all_forward.1} parent=71 // pred_region
          %423 = dma.done [#allocation3], 16
        $region76: #{wav2all_forward.1} parent=71 // pred_fallthru
          _
        // Predicated region
        $region77: #{wav2all_forward.1} parent=71 // pred_check
          %p424 = pneg %p131
        $region78: #{wav2all_forward.1} parent=71 // pred_check_branch
          %426 = sbr.rel (%p424) target = $region80
        $region79: #{wav2all_forward.1} parent=71 // pred_region
          %427 = dma.done [#allocation5], 80
        $region80: #{wav2all_forward.1} parent=71 // pred_fallthru
          _
        // Predicated region
        $region81: #{wav2all_forward.1} parent=71 // pred_check
          %p428 = pneg %p299
        $region82: #{wav2all_forward.1} parent=71 // pred_check_branch
          %430 = sbr.rel (%p428) target = $region84
        $region83: #{wav2all_forward.1} parent=71 // pred_region
          %431 = dma.done [#allocation5], 16
        $region84: #{wav2all_forward.1} parent=71 // pred_fallthru
          _
        %p432 = scmp.lt.s32.totalorder %s26, 1
        %s433 = scalar_select %p432, %s26, 1
        %s434 = smul.addr %s433, 4
        %s435 = scalar_lea.vmem %s0, %s434
        %p436 = pneg %p47
        %p437 = pneg %p44
        %p438 = pneg %p68
        %p439 = pneg %p65
        %p440 = pneg %p89
        %p441 = pneg %p86
        %p442 = pneg %p110
        %p443 = pneg %p107
        %p444 = pneg %p131
        %p445 = pneg %p128
        %p446 = pneg %p152
        %p447 = pneg %p149
        %p448 = pneg %p173
        %p449 = pneg %p170
        %p450 = pneg %p194
        %p451 = pneg %p191
        %p452 = pneg %p215
        %p453 = pneg %p212
        %p454 = pneg %p236
        %p455 = pneg %p233
        %p456 = pneg %p257
        %p457 = pneg %p254
        %p458 = pneg %p278
        %p459 = pneg %p275
        %p460 = pneg %p299
        %p461 = pneg %p296
        %p462 = pneg %p325
        %p463 = pneg %p322
        %p464 = scmp.lt.s32.totalorder %s26, 1
        %s465 = scalar_select %p464, %s26, 1
        %s466 = smul.addr %s465, 8
        %s467 = scalar_lea.vmem %s13, %s466
        %p468 = scmp.lt.s32.totalorder %s26, 1
        %s469 = scalar_select %p468, %s26, 1
        %s470 = smul.addr %s469, 4
        %s471 = scalar_lea.vmem %s0, %s470
        %p472 = scmp.lt.s32.totalorder %s26, 1
        %s473 = scalar_select %p472, %s26, 1
        %s474 = smul.addr %s473, 8
        %s475 = scalar_lea.vmem %s13, %s474
        %v477 = vld [vmem:[%s471] sm:$0xf]
        %v478 = vld [vmem:[%s1] sm:$0xf]
        %v479 = vld [vmem:[%s1 + $0x4] sm:$0xf]
        %v480 = vld [vmem:[%s1 + $0x8] sm:$0xf]
        %v481 = vld [vmem:[%s1 + $0xc] sm:$0xf]
        %v482 = vld [vmem:[%s1 + $0x10] sm:$0xf]
        %v483 = vld [vmem:[#allocation2] sm:$0x1]
        %v485 = vlaneseq
        %v486 = vshrl.u32 %v485, 7
        %v487 = vsub.s32 0, %v486
        %v488 = vrot.slane %v483, %v487
        %v495 = vunpack.c.l.b16 %v478
        %v496 = vunpack.c.l.b16 %v479
        %v497 = vunpack.c.l.b16 %v480
        %v498 = vunpack.c.l.b16 %v481
        %v499 = vunpack.c.l.b16 %v482
        %v500 = vpack.c.b16 %v496, %v495
        %v501 = vpack.c.b16 %v498, %v497
        %v502 = vpack.c.b16 %v499, %v499
        %vm505 = vcmask 326656
        %v507 = vsel %vm505, %v477, 0
        %vm509 = vcmask 1043456
        %v511 = vsel %vm509, %v502, 0
        %513 = vmatprep.subr.bf16.mxu0 0
        %514 = vmatpush1.bf16.msra.mxu0 %v500
        %515 = vmatprep.subr.bf16.mxu0 0
        %516 = vmatpush1.bf16.msra.mxu0 %v501
        %517 = vmatprep.subr.bf16.mxu0 0
        %518 = vmatpush1.bf16.msra.mxu0 %v511
        %519 = vmatprep.subr.bf16.mxu0 0
        %520 = vmatpush1.bf16.msra.mxu0 0
        %521 = vmatprep.subr.bf16.mxu0 0
        %522 = vmatpush1.bf16.msra.mxu0 0
        %523 = vmatprep.subr.bf16.mxu0 0
        %524 = vmatpush1.bf16.msra.mxu0 0
        %525 = vmatprep.subr.bf16.mxu0 0
        %526 = vmatpush1.bf16.msra.mxu0 0
        %527 = vmatprep.subr.bf16.mxu0 0
        %528 = vmatpush1.bf16.msra.mxu0 0
        %529 = vmatprep.subr.bf16.mxu0 0
        %530 = vmatpush1.bf16.msra.mxu0 0
        %531 = vmatprep.subr.bf16.mxu0 0
        %532 = vmatpush1.bf16.msra.mxu0 0
        %533 = vmatprep.subr.bf16.mxu0 0
        %534 = vmatpush1.bf16.msra.mxu0 0
        %535 = vmatprep.subr.bf16.mxu0 0
        %536 = vmatpush1.bf16.msra.mxu0 0
        %537 = vmatprep.subr.bf16.mxu0 0
        %538 = vmatpush1.bf16.msra.mxu0 0
        %539 = vmatprep.subr.bf16.mxu0 0
        %540 = vmatpush1.bf16.msra.mxu0 0
        %541 = vmatprep.subr.bf16.mxu0 0
        %542 = vmatpush1.bf16.msra.mxu0 0
        %543 = vmatprep.subr.bf16.mxu0 0
        %544 = vmatpush1.bf16.msra.mxu0 0
        %545 = vmatprep.mubr.bf16.mxu0 0
        %546 = vmatmul.mubr.bf16.gmra.mrb[0].mxu0 %v507
        %v547 = vpop.f32.mrb[0].mxu0
        %v548 = vadd.f32 %v488, %v547
        %v549 = vpop.f32.mrb[0].mxu0
        %v550 = vpop.f32.mrb[0].mxu0
        %v551 = vpop.f32.mrb[0].mxu0
        %552 = vdwg.mxu0
        %v553 = vtanh.pop %v548
        %v554 = vpack.c.bf16 %v553, %v553
        %v555 = vld [vmem:[%s3] sm:$0xf]
        %v556 = vld [vmem:[%s3 + $0x4] sm:$0xf]
        %v557 = vld [vmem:[%s3 + $0x8] sm:$0xf]
        %v558 = vld [vmem:[%s3 + $0xc] sm:$0xf]
        %v559 = vld [vmem:[#allocation4] sm:$0x1]
        %v561 = vlaneseq
        %v562 = vshrl.u32 %v561, 7
        %v563 = vsub.s32 0, %v562
        %v564 = vrot.slane %v559, %v563
        %v570 = vunpack.c.l.b16 %v555
        %v571 = vunpack.c.l.b16 %v556
        %v572 = vunpack.c.l.b16 %v557
        %v573 = vunpack.c.l.b16 %v558
        %v574 = vpack.c.b16 %v571, %v570
        %v575 = vpack.c.b16 %v573, %v572
        %vm578 = vcmask 261120
        %v580 = vsel %vm578, %v554, 0
        %582 = vmatprep.subr.bf16.mxu0 0
        %583 = vmatpush1.bf16.msra.mxu0 %v574
        %584 = vmatprep.subr.bf16.mxu0 0
        %585 = vmatpush1.bf16.msra.mxu0 %v575
        %586 = vmatprep.subr.bf16.mxu0 0
        %587 = vmatpush1.bf16.msra.mxu0 0
        %588 = vmatprep.subr.bf16.mxu0 0
        %589 = vmatpush1.bf16.msra.mxu0 0
        %590 = vmatprep.subr.bf16.mxu0 0
        %591 = vmatpush1.bf16.msra.mxu0 0
        %592 = vmatprep.subr.bf16.mxu0 0
        %593 = vmatpush1.bf16.msra.mxu0 0
        %594 = vmatprep.subr.bf16.mxu0 0
        %595 = vmatpush1.bf16.msra.mxu0 0
        %596 = vmatprep.subr.bf16.mxu0 0
        %597 = vmatpush1.bf16.msra.mxu0 0
        %598 = vmatprep.subr.bf16.mxu0 0
        %599 = vmatpush1.bf16.msra.mxu0 0
        %600 = vmatprep.subr.bf16.mxu0 0
        %601 = vmatpush1.bf16.msra.mxu0 0
        %602 = vmatprep.subr.bf16.mxu0 0
        %603 = vmatpush1.bf16.msra.mxu0 0
        %604 = vmatprep.subr.bf16.mxu0 0
        %605 = vmatpush1.bf16.msra.mxu0 0
        %606 = vmatprep.subr.bf16.mxu0 0
        %607 = vmatpush1.bf16.msra.mxu0 0
        %608 = vmatprep.subr.bf16.mxu0 0
        %609 = vmatpush1.bf16.msra.mxu0 0
        %610 = vmatprep.subr.bf16.mxu0 0
        %611 = vmatpush1.bf16.msra.mxu0 0
        %612 = vmatprep.subr.bf16.mxu0 0
        %613 = vmatpush1.bf16.msra.mxu0 0
        %614 = vmatprep.mubr.bf16.mxu0 0
        %615 = vmatmul.mubr.bf16.gmra.mrb[0].mxu0 %v580
        %v616 = vpop.f32.mrb[0].mxu0
        %v617 = vadd.f32 %v564, %v616
        %v618 = vpop.f32.mrb[0].mxu0
        %v619 = vpop.f32.mrb[0].mxu0
        %v620 = vpop.f32.mrb[0].mxu0
        %621 = vdwg.mxu0
        %v622 = vtanh.pop %v617
        %v623 = vpack.c.bf16 %v622, %v622
        %s624 = scalar_lea.vmem %s3, 16
        %v625 = vld [vmem:[%s624] sm:$0xf]
        %v626 = vld [vmem:[%s624 + $0x4] sm:$0xf]
        %v627 = vld [vmem:[%s624 + $0x8] sm:$0xf]
        %v628 = vld [vmem:[%s624 + $0xc] sm:$0xf]
        %s629 = scalar_lea.vmem [#allocation4], 1
        %v630 = vld [vmem:[%s629] sm:$0x1]
        %v632 = vlaneseq
        %v633 = vshrl.u32 %v632, 7
        %v634 = vsub.s32 0, %v633
        %v635 = vrot.slane %v630, %v634
        %v641 = vunpack.c.l.b16 %v625
        %v642 = vunpack.c.l.b16 %v626
        %v643 = vunpack.c.l.b16 %v627
        %v644 = vunpack.c.l.b16 %v628
        %v645 = vpack.c.b16 %v642, %v641
        %v646 = vpack.c.b16 %v644, %v643
        %v650 = vsel %vm578, %v623, 0
        %652 = vmatprep.subr.bf16.mxu0 0
        %653 = vmatpush1.bf16.msra.mxu0 %v645
        %654 = vmatprep.subr.bf16.mxu0 0
        %655 = vmatpush1.bf16.msra.mxu0 %v646
        %656 = vmatprep.subr.bf16.mxu0 0
        %657 = vmatpush1.bf16.msra.mxu0 0
        %658 = vmatprep.subr.bf16.mxu0 0
        %659 = vmatpush1.bf16.msra.mxu0 0
        %660 = vmatprep.subr.bf16.mxu0 0
        %661 = vmatpush1.bf16.msra.mxu0 0
        %662 = vmatprep.subr.bf16.mxu0 0
        %663 = vmatpush1.bf16.msra.mxu0 0
        %664 = vmatprep.subr.bf16.mxu0 0
        %665 = vmatpush1.bf16.msra.mxu0 0
        %666 = vmatprep.subr.bf16.mxu0 0
        %667 = vmatpush1.bf16.msra.mxu0 0
        %668 = vmatprep.subr.bf16.mxu0 0
        %669 = vmatpush1.bf16.msra.mxu0 0
        %670 = vmatprep.subr.bf16.mxu0 0
        %671 = vmatpush1.bf16.msra.mxu0 0
        %672 = vmatprep.subr.bf16.mxu0 0
        %673 = vmatpush1.bf16.msra.mxu0 0
        %674 = vmatprep.subr.bf16.mxu0 0
        %675 = vmatpush1.bf16.msra.mxu0 0
        %676 = vmatprep.subr.bf16.mxu0 0
        %677 = vmatpush1.bf16.msra.mxu0 0
        %678 = vmatprep.subr.bf16.mxu0 0
        %679 = vmatpush1.bf16.msra.mxu0 0
        %680 = vmatprep.subr.bf16.mxu0 0
        %681 = vmatpush1.bf16.msra.mxu0 0
        %682 = vmatprep.subr.bf16.mxu0 0
        %683 = vmatpush1.bf16.msra.mxu0 0
        %684 = vmatprep.mubr.bf16.mxu0 0
        %685 = vmatmul.mubr.bf16.gmra.mrb[0].mxu0 %v650
        %v686 = vpop.f32.mrb[0].mxu0
        %v687 = vadd.f32 %v635, %v686
        %v688 = vpop.f32.mrb[0].mxu0
        %v689 = vpop.f32.mrb[0].mxu0
        %v690 = vpop.f32.mrb[0].mxu0
        %691 = vdwg.mxu0
        %v692 = vtanh.pop %v687
        %v693 = vpack.c.bf16 %v692, %v692
        %s694 = scalar_lea.vmem %s3, 32
        %v695 = vld [vmem:[%s694] sm:$0xf]
        %v696 = vld [vmem:[%s694 + $0x4] sm:$0xf]
        %v697 = vld [vmem:[%s694 + $0x8] sm:$0xf]
        %v698 = vld [vmem:[%s694 + $0xc] sm:$0xf]
        %s699 = scalar_lea.vmem [#allocation4], 2
        %v700 = vld [vmem:[%s699] sm:$0x1]
        %v702 = vlaneseq
        %v703 = vshrl.u32 %v702, 7
        %v704 = vsub.s32 0, %v703
        %v705 = vrot.slane %v700, %v704
        %v711 = vunpack.c.l.b16 %v695
        %v712 = vunpack.c.l.b16 %v696
        %v713 = vunpack.c.l.b16 %v697
        %v714 = vunpack.c.l.b16 %v698
        %v715 = vpack.c.b16 %v712, %v711
        %v716 = vpack.c.b16 %v714, %v713
        %v720 = vsel %vm578, %v693, 0
        %722 = vmatprep.subr.bf16.mxu0 0
        %723 = vmatpush1.bf16.msra.mxu0 %v715
        %724 = vmatprep.subr.bf16.mxu0 0
        %725 = vmatpush1.bf16.msra.mxu0 %v716
        %726 = vmatprep.subr.bf16.mxu0 0
        %727 = vmatpush1.bf16.msra.mxu0 0
        %728 = vmatprep.subr.bf16.mxu0 0
        %729 = vmatpush1.bf16.msra.mxu0 0
        %730 = vmatprep.subr.bf16.mxu0 0
        %731 = vmatpush1.bf16.msra.mxu0 0
        %732 = vmatprep.subr.bf16.mxu0 0
        %733 = vmatpush1.bf16.msra.mxu0 0
        %734 = vmatprep.subr.bf16.mxu0 0
        %735 = vmatpush1.bf16.msra.mxu0 0
        %736 = vmatprep.subr.bf16.mxu0 0
        %737 = vmatpush1.bf16.msra.mxu0 0
        %738 = vmatprep.subr.bf16.mxu0 0
        %739 = vmatpush1.bf16.msra.mxu0 0
        %740 = vmatprep.subr.bf16.mxu0 0
        %741 = vmatpush1.bf16.msra.mxu0 0
        %742 = vmatprep.subr.bf16.mxu0 0
        %743 = vmatpush1.bf16.msra.mxu0 0
        %744 = vmatprep.subr.bf16.mxu0 0
        %745 = vmatpush1.bf16.msra.mxu0 0
        %746 = vmatprep.subr.bf16.mxu0 0
        %747 = vmatpush1.bf16.msra.mxu0 0
        %748 = vmatprep.subr.bf16.mxu0 0
        %749 = vmatpush1.bf16.msra.mxu0 0
        %750 = vmatprep.subr.bf16.mxu0 0
        %751 = vmatpush1.bf16.msra.mxu0 0
        %752 = vmatprep.subr.bf16.mxu0 0
        %753 = vmatpush1.bf16.msra.mxu0 0
        %754 = vmatprep.mubr.bf16.mxu0 0
        %755 = vmatmul.mubr.bf16.gmra.mrb[0].mxu0 %v720
        %v756 = vpop.f32.mrb[0].mxu0
        %v757 = vadd.f32 %v705, %v756
        %v758 = vpop.f32.mrb[0].mxu0
        %v759 = vpop.f32.mrb[0].mxu0
        %v760 = vpop.f32.mrb[0].mxu0
        %761 = vdwg.mxu0
        %v762 = vtanh.pop %v757
        %v763 = vpack.c.bf16 %v762, %v762
        %s764 = scalar_lea.vmem %s3, 48
        %v765 = vld [vmem:[%s764] sm:$0xf]
        %v766 = vld [vmem:[%s764 + $0x4] sm:$0xf]
        %v767 = vld [vmem:[%s764 + $0x8] sm:$0xf]
        %v768 = vld [vmem:[%s764 + $0xc] sm:$0xf]
        %s769 = scalar_lea.vmem [#allocation4], 3
        %v770 = vld [vmem:[%s769] sm:$0x1]
        %v772 = vlaneseq
        %v773 = vshrl.u32 %v772, 7
        %v774 = vsub.s32 0, %v773
        %v775 = vrot.slane %v770, %v774
        %v781 = vunpack.c.l.b16 %v765
        %v782 = vunpack.c.l.b16 %v766
        %v783 = vunpack.c.l.b16 %v767
        %v784 = vunpack.c.l.b16 %v768
        %v785 = vpack.c.b16 %v782, %v781
        %v786 = vpack.c.b16 %v784, %v783
        %v790 = vsel %vm578, %v763, 0
        %792 = vmatprep.subr.bf16.mxu0 0
        %793 = vmatpush1.bf16.msra.mxu0 %v785
        %794 = vmatprep.subr.bf16.mxu0 0
        %795 = vmatpush1.bf16.msra.mxu0 %v786
        %796 = vmatprep.subr.bf16.mxu0 0
        %797 = vmatpush1.bf16.msra.mxu0 0
        %798 = vmatprep.subr.bf16.mxu0 0
        %799 = vmatpush1.bf16.msra.mxu0 0
        %800 = vmatprep.subr.bf16.mxu0 0
        %801 = vmatpush1.bf16.msra.mxu0 0
        %802 = vmatprep.subr.bf16.mxu0 0
        %803 = vmatpush1.bf16.msra.mxu0 0
        %804 = vmatprep.subr.bf16.mxu0 0
        %805 = vmatpush1.bf16.msra.mxu0 0
        %806 = vmatprep.subr.bf16.mxu0 0
        %807 = vmatpush1.bf16.msra.mxu0 0
        %808 = vmatprep.subr.bf16.mxu0 0
        %809 = vmatpush1.bf16.msra.mxu0 0
        %810 = vmatprep.subr.bf16.mxu0 0
        %811 = vmatpush1.bf16.msra.mxu0 0
        %812 = vmatprep.subr.bf16.mxu0 0
        %813 = vmatpush1.bf16.msra.mxu0 0
        %814 = vmatprep.subr.bf16.mxu0 0
        %815 = vmatpush1.bf16.msra.mxu0 0
        %816 = vmatprep.subr.bf16.mxu0 0
        %817 = vmatpush1.bf16.msra.mxu0 0
        %818 = vmatprep.subr.bf16.mxu0 0
        %819 = vmatpush1.bf16.msra.mxu0 0
        %820 = vmatprep.subr.bf16.mxu0 0
        %821 = vmatpush1.bf16.msra.mxu0 0
        %822 = vmatprep.subr.bf16.mxu0 0
        %823 = vmatpush1.bf16.msra.mxu0 0
        %824 = vmatprep.mubr.bf16.mxu0 0
        %825 = vmatmul.mubr.bf16.gmra.mrb[0].mxu0 %v790
        %v826 = vpop.f32.mrb[0].mxu0
        %v827 = vadd.f32 %v775, %v826
        %v828 = vpop.f32.mrb[0].mxu0
        %v829 = vpop.f32.mrb[0].mxu0
        %v830 = vpop.f32.mrb[0].mxu0
        %831 = vdwg.mxu0
        %v832 = vtanh.pop %v827
        %v833 = vpack.c.bf16 %v832, %v832
        %s834 = scalar_lea.vmem %s3, 64
        %v835 = vld [vmem:[%s834] sm:$0xf]
        %v836 = vld [vmem:[%s834 + $0x4] sm:$0xf]
        %v837 = vld [vmem:[%s834 + $0x8] sm:$0xf]
        %v838 = vld [vmem:[%s834 + $0xc] sm:$0xf]
        %s839 = scalar_lea.vmem [#allocation4], 4
        %v840 = vld [vmem:[%s839] sm:$0x1]
        %v842 = vlaneseq
        %v843 = vshrl.u32 %v842, 7
        %v844 = vsub.s32 0, %v843
        %v845 = vrot.slane %v840, %v844
        %v851 = vunpack.c.l.b16 %v835
        %v852 = vunpack.c.l.b16 %v836
        %v853 = vunpack.c.l.b16 %v837
        %v854 = vunpack.c.l.b16 %v838
        %v855 = vpack.c.b16 %v852, %v851
        %v856 = vpack.c.b16 %v854, %v853
        %v860 = vsel %vm578, %v833, 0
        %862 = vmatprep.subr.bf16.mxu0 0
        %863 = vmatpush1.bf16.msra.mxu0 %v855
        %864 = vmatprep.subr.bf16.mxu0 0
        %865 = vmatpush1.bf16.msra.mxu0 %v856
        %866 = vmatprep.subr.bf16.mxu0 0
        %867 = vmatpush1.bf16.msra.mxu0 0
        %868 = vmatprep.subr.bf16.mxu0 0
        %869 = vmatpush1.bf16.msra.mxu0 0
        %870 = vmatprep.subr.bf16.mxu0 0
        %871 = vmatpush1.bf16.msra.mxu0 0
        %872 = vmatprep.subr.bf16.mxu0 0
        %873 = vmatpush1.bf16.msra.mxu0 0
        %874 = vmatprep.subr.bf16.mxu0 0
        %875 = vmatpush1.bf16.msra.mxu0 0
        %876 = vmatprep.subr.bf16.mxu0 0
        %877 = vmatpush1.bf16.msra.mxu0 0
        %878 = vmatprep.subr.bf16.mxu0 0
        %879 = vmatpush1.bf16.msra.mxu0 0
        %880 = vmatprep.subr.bf16.mxu0 0
        %881 = vmatpush1.bf16.msra.mxu0 0
        %882 = vmatprep.subr.bf16.mxu0 0
        %883 = vmatpush1.bf16.msra.mxu0 0
        %884 = vmatprep.subr.bf16.mxu0 0
        %885 = vmatpush1.bf16.msra.mxu0 0
        %886 = vmatprep.subr.bf16.mxu0 0
        %887 = vmatpush1.bf16.msra.mxu0 0
        %888 = vmatprep.subr.bf16.mxu0 0
        %889 = vmatpush1.bf16.msra.mxu0 0
        %890 = vmatprep.subr.bf16.mxu0 0
        %891 = vmatpush1.bf16.msra.mxu0 0
        %892 = vmatprep.subr.bf16.mxu0 0
        %893 = vmatpush1.bf16.msra.mxu0 0
        %894 = vmatprep.mubr.bf16.mxu0 0
        %895 = vmatmul.mubr.bf16.gmra.mrb[0].mxu0 %v860
        %v896 = vpop.f32.mrb[0].mxu0
        %v897 = vadd.f32 %v845, %v896
        %v898 = vpop.f32.mrb[0].mxu0
        %v899 = vpop.f32.mrb[0].mxu0
        %v900 = vpop.f32.mrb[0].mxu0
        %901 = vdwg.mxu0
        %v902 = vtanh.pop %v897
        %v903 = vpack.c.bf16 %v902, %v902
        %v904 = vld [vmem:[%s6] sm:$0xf]
        %v905 = vld [vmem:[%s6 + $0x4] sm:$0xf]
        %v906 = vld [vmem:[%s6 + $0x8] sm:$0xf]
        %v907 = vld [vmem:[%s6 + $0xc] sm:$0xf]
        %v908 = vld [vmem:[%s7] sm:$0x1]
        %v910 = vlaneseq
        %v911 = vshrl.u32 %v910, 7
        %v912 = vsub.s32 0, %v911
        %v913 = vrot.slane %v908, %v912
        %v919 = vunpack.c.l.b16 %v904
        %v920 = vunpack.c.l.b16 %v905
        %v921 = vunpack.c.l.b16 %v906
        %v922 = vunpack.c.l.b16 %v907
        %v923 = vpack.c.b16 %v920, %v919
        %v924 = vpack.c.b16 %v922, %v921
        %927 = vmatprep.subr.bf16.mxu0 0
        %928 = vmatpush1.bf16.msra.mxu0 %v923
        %929 = vmatprep.subr.bf16.mxu0 0
        %930 = vmatpush1.bf16.msra.mxu0 %v924
        %931 = vmatprep.subr.bf16.mxu0 0
        %932 = vmatpush1.bf16.msra.mxu0 0
        %933 = vmatprep.subr.bf16.mxu0 0
        %934 = vmatpush1.bf16.msra.mxu0 0
        %935 = vmatprep.subr.bf16.mxu0 0
        %936 = vmatpush1.bf16.msra.mxu0 0
        %937 = vmatprep.subr.bf16.mxu0 0
        %938 = vmatpush1.bf16.msra.mxu0 0
        %939 = vmatprep.subr.bf16.mxu0 0
        %940 = vmatpush1.bf16.msra.mxu0 0
        %941 = vmatprep.subr.bf16.mxu0 0
        %942 = vmatpush1.bf16.msra.mxu0 0
        %943 = vmatprep.subr.bf16.mxu0 0
        %944 = vmatpush1.bf16.msra.mxu0 0
        %945 = vmatprep.subr.bf16.mxu0 0
        %946 = vmatpush1.bf16.msra.mxu0 0
        %947 = vmatprep.subr.bf16.mxu0 0
        %948 = vmatpush1.bf16.msra.mxu0 0
        %949 = vmatprep.subr.bf16.mxu0 0
        %950 = vmatpush1.bf16.msra.mxu0 0
        %951 = vmatprep.subr.bf16.mxu0 0
        %952 = vmatpush1.bf16.msra.mxu0 0
        %953 = vmatprep.subr.bf16.mxu0 0
        %954 = vmatpush1.bf16.msra.mxu0 0
        %955 = vmatprep.subr.bf16.mxu0 0
        %956 = vmatpush1.bf16.msra.mxu0 0
        %957 = vmatprep.subr.bf16.mxu0 0
        %958 = vmatpush1.bf16.msra.mxu0 0
        %959 = vmatprep.mubr.bf16.mxu0 0
        %960 = vmatmul.mubr.bf16.gmra.mrb[0].mxu0 %v860
        %v961 = vpop.f32.mrb[0].mxu0
        %v962 = vadd.f32 %v913, %v961
        %v963 = vpop.f32.mrb[0].mxu0
        %v964 = vpop.f32.mrb[0].mxu0
        %v965 = vpop.f32.mrb[0].mxu0
        %966 = vdwg.mxu0
        %v967 = vld [vmem:[%s8] sm:$0xf]
        %v968 = vld [vmem:[%s8 + $0x4] sm:$0xf]
        %v969 = vld [vmem:[%s8 + $0x8] sm:$0xf]
        %v970 = vld [vmem:[%s8 + $0xc] sm:$0xf]
        %v971 = vld [vmem:[%s9] sm:$0x1]
        %v973 = vlaneseq
        %v974 = vshrl.u32 %v973, 7
        %v975 = vsub.s32 0, %v974
        %v976 = vrot.slane %v971, %v975
        %v982 = vunpack.c.l.b16 %v967
        %v983 = vunpack.c.l.b16 %v968
        %v984 = vunpack.c.l.b16 %v969
        %v985 = vunpack.c.l.b16 %v970
        %v986 = vpack.c.b16 %v983, %v982
        %v987 = vpack.c.b16 %v985, %v984
        %990 = vmatprep.subr.bf16.mxu0 0
        %991 = vmatpush1.bf16.msra.mxu0 %v986
        %992 = vmatprep.subr.bf16.mxu0 0
        %993 = vmatpush1.bf16.msra.mxu0 %v987
        %994 = vmatprep.subr.bf16.mxu0 0
        %995 = vmatpush1.bf16.msra.mxu0 0
        %996 = vmatprep.subr.bf16.mxu0 0
        %997 = vmatpush1.bf16.msra.mxu0 0
        %998 = vmatprep.subr.bf16.mxu0 0
        %999 = vmatpush1.bf16.msra.mxu0 0
        %1000 = vmatprep.subr.bf16.mxu0 0
        %1001 = vmatpush1.bf16.msra.mxu0 0
        %1002 = vmatprep.subr.bf16.mxu0 0
        %1003 = vmatpush1.bf16.msra.mxu0 0
        %1004 = vmatprep.subr.bf16.mxu0 0
        %1005 = vmatpush1.bf16.msra.mxu0 0
        %1006 = vmatprep.subr.bf16.mxu0 0
        %1007 = vmatpush1.bf16.msra.mxu0 0
        %1008 = vmatprep.subr.bf16.mxu0 0
        %1009 = vmatpush1.bf16.msra.mxu0 0
        %1010 = vmatprep.subr.bf16.mxu0 0
        %1011 = vmatpush1.bf16.msra.mxu0 0
        %1012 = vmatprep.subr.bf16.mxu0 0
        %1013 = vmatpush1.bf16.msra.mxu0 0
        %1014 = vmatprep.subr.bf16.mxu0 0
        %1015 = vmatpush1.bf16.msra.mxu0 0
        %1016 = vmatprep.subr.bf16.mxu0 0
        %1017 = vmatpush1.bf16.msra.mxu0 0
        %1018 = vmatprep.subr.bf16.mxu0 0
        %1019 = vmatpush1.bf16.msra.mxu0 0
        %1020 = vmatprep.subr.bf16.mxu0 0
        %1021 = vmatpush1.bf16.msra.mxu0 0
        %1022 = vmatprep.mubr.bf16.mxu0 0
        %1023 = vmatmul.mubr.bf16.gmra.mrb[0].mxu0 %v860
        %v1024 = vpop.f32.mrb[0].mxu0
        %v1025 = vadd.f32 %v976, %v1024
        %v1026 = vpop.f32.mrb[0].mxu0
        %v1027 = vpop.f32.mrb[0].mxu0
        %v1028 = vpop.f32.mrb[0].mxu0
        %1029 = vdwg.mxu0
        %v1030 = vld [vmem:[%s5] sm:$0xf]
        %v1031 = vld [vmem:[%s5 + $0x4] sm:$0xf]
        %v1032 = vld [vmem:[%s5 + $0x8] sm:$0xf]
        %v1033 = vld [vmem:[%s5 + $0xc] sm:$0xf]
        %v1034 = vpack.c.bf16 %v962, %v962
        %v1035 = vld [vmem:[%s10] sm:$0xf]
        %v1036 = vld [vmem:[%s10 + $0x4] sm:$0xf]
        %v1037 = vld [vmem:[%s10 + $0x8] sm:$0xf]
        %v1038 = vld [vmem:[%s10 + $0xc] sm:$0xf]
        %v1039 = vld [vmem:[%s10 + $0x10] sm:$0xf]
        %v1040 = vld [vmem:[%s10 + $0x14] sm:$0xf]
        %v1041 = vld [vmem:[%s10 + $0x18] sm:$0xf]
        %v1042 = vld [vmem:[%s10 + $0x1c] sm:$0xf]
        %v1051 = vunpack.c.l.b16 %v1035
        %v1052 = vunpack.c.l.b16 %v1036
        %v1053 = vunpack.c.l.b16 %v1037
        %v1054 = vunpack.c.l.b16 %v1038
        %v1055 = vunpack.c.l.b16 %v1039
        %v1056 = vunpack.c.l.b16 %v1040
        %v1057 = vunpack.c.l.b16 %v1041
        %v1058 = vunpack.c.l.b16 %v1042
        %v1059 = vpack.c.b16 %v1052, %v1051
        %v1060 = vpack.c.b16 %v1054, %v1053
        %v1061 = vpack.c.b16 %v1056, %v1055
        %v1062 = vpack.c.b16 %v1058, %v1057
        %vm1067 = vcmask 523264
        %v1069 = vsel %vm1067, %v1034, 0
        %1071 = vmatprep.subr.bf16.mxu0 0
        %1072 = vmatpush1.bf16.msra.mxu0 %v1059
        %1073 = vmatprep.subr.bf16.mxu0 0
        %1074 = vmatpush1.bf16.msra.mxu0 %v1060
        %1075 = vmatprep.subr.bf16.mxu0 0
        %1076 = vmatpush1.bf16.msra.mxu0 %v1061
        %1077 = vmatprep.subr.bf16.mxu0 0
        %1078 = vmatpush1.bf16.msra.mxu0 %v1062
        %1079 = vmatprep.subr.bf16.mxu0 0
        %1080 = vmatpush1.bf16.msra.mxu0 0
        %1081 = vmatprep.subr.bf16.mxu0 0
        %1082 = vmatpush1.bf16.msra.mxu0 0
        %1083 = vmatprep.subr.bf16.mxu0 0
        %1084 = vmatpush1.bf16.msra.mxu0 0
        %1085 = vmatprep.subr.bf16.mxu0 0
        %1086 = vmatpush1.bf16.msra.mxu0 0
        %1087 = vmatprep.subr.bf16.mxu0 0
        %1088 = vmatpush1.bf16.msra.mxu0 0
        %1089 = vmatprep.subr.bf16.mxu0 0
        %1090 = vmatpush1.bf16.msra.mxu0 0
        %1091 = vmatprep.subr.bf16.mxu0 0
        %1092 = vmatpush1.bf16.msra.mxu0 0
        %1093 = vmatprep.subr.bf16.mxu0 0
        %1094 = vmatpush1.bf16.msra.mxu0 0
        %1095 = vmatprep.subr.bf16.mxu0 0
        %1096 = vmatpush1.bf16.msra.mxu0 0
        %1097 = vmatprep.subr.bf16.mxu0 0
        %1098 = vmatpush1.bf16.msra.mxu0 0
        %1099 = vmatprep.subr.bf16.mxu0 0
        %1100 = vmatpush1.bf16.msra.mxu0 0
        %1101 = vmatprep.subr.bf16.mxu0 0
        %1102 = vmatpush1.bf16.msra.mxu0 0
        %1103 = vmatprep.mubr.bf16.mxu0 0
        %1104 = vmatmul.mubr.bf16.gmra.mrb[0].mxu0 %v1069
        %v1105 = vpop.f32.mrb[0].mxu0
        %v1106 = vadd.f32 0.0, %v1105
        %v1107 = vpop.f32.mrb[0].mxu0
        %v1108 = vpop.f32.mrb[0].mxu0
        %v1109 = vpop.f32.mrb[0].mxu0
        %1110 = vdwg.mxu0
        %v1115 = vunpack.c.l.b16 %v1030
        %v1116 = vunpack.c.l.b16 %v1031
        %v1117 = vunpack.c.l.b16 %v1032
        %v1118 = vunpack.c.l.b16 %v1033
        %v1119 = vpack.c.b16 %v1116, %v1115
        %v1120 = vpack.c.b16 %v1118, %v1117
        %v1124 = vsel %vm578, %v903, 0
        %1126 = vmatprep.subr.bf16.mxu0 0
        %1127 = vmatpush1.bf16.msra.mxu0 %v1119
        %1128 = vmatprep.subr.bf16.mxu0 0
        %1129 = vmatpush1.bf16.msra.mxu0 %v1120
        %1130 = vmatprep.subr.bf16.mxu0 0
        %1131 = vmatpush1.bf16.msra.mxu0 0
        %1132 = vmatprep.subr.bf16.mxu0 0
        %1133 = vmatpush1.bf16.msra.mxu0 0
        %1134 = vmatprep.subr.bf16.mxu0 0
        %1135 = vmatpush1.bf16.msra.mxu0 0
        %1136 = vmatprep.subr.bf16.mxu0 0
        %1137 = vmatpush1.bf16.msra.mxu0 0
        %1138 = vmatprep.subr.bf16.mxu0 0
        %1139 = vmatpush1.bf16.msra.mxu0 0
        %1140 = vmatprep.subr.bf16.mxu0 0
        %1141 = vmatpush1.bf16.msra.mxu0 0
        %1142 = vmatprep.subr.bf16.mxu0 0
        %1143 = vmatpush1.bf16.msra.mxu0 0
        %1144 = vmatprep.subr.bf16.mxu0 0
        %1145 = vmatpush1.bf16.msra.mxu0 0
        %1146 = vmatprep.subr.bf16.mxu0 0
        %1147 = vmatpush1.bf16.msra.mxu0 0
        %1148 = vmatprep.subr.bf16.mxu0 0
        %1149 = vmatpush1.bf16.msra.mxu0 0
        %1150 = vmatprep.subr.bf16.mxu0 0
        %1151 = vmatpush1.bf16.msra.mxu0 0
        %1152 = vmatprep.subr.bf16.mxu0 0
        %1153 = vmatpush1.bf16.msra.mxu0 0
        %1154 = vmatprep.subr.bf16.mxu0 0
        %1155 = vmatpush1.bf16.msra.mxu0 0
        %1156 = vmatprep.subr.bf16.mxu0 0
        %1157 = vmatpush1.bf16.msra.mxu0 0
        %1158 = vmatprep.mubr.bf16.mxu0 0
        %1159 = vmatmul.mubr.bf16.gmra.mrb[0].mxu0 %v1124
        %v1160 = vpop.f32.mrb[0].mxu0
        %v1161 = vadd.f32 %v1106, %v1160
        %v1162 = vpop.f32.mrb[0].mxu0
        %v1163 = vpop.f32.mrb[0].mxu0
        %v1164 = vpop.f32.mrb[0].mxu0
        %1165 = vdwg.mxu0
        %v1166 = vpack.c.bf16 %v1025, %v1025
        %v1167 = vld [vmem:[%s11] sm:$0xf]
        %v1168 = vld [vmem:[%s11 + $0x4] sm:$0xf]
        %v1169 = vld [vmem:[%s11 + $0x8] sm:$0xf]
        %v1170 = vld [vmem:[%s11 + $0xc] sm:$0xf]
        %v1171 = vld [vmem:[%s11 + $0x10] sm:$0xf]
        %v1172 = vld [vmem:[%s11 + $0x14] sm:$0xf]
        %v1173 = vld [vmem:[%s11 + $0x18] sm:$0xf]
        %v1174 = vld [vmem:[%s11 + $0x1c] sm:$0xf]
        %v1183 = vunpack.c.l.b16 %v1167
        %v1184 = vunpack.c.l.b16 %v1168
        %v1185 = vunpack.c.l.b16 %v1169
        %v1186 = vunpack.c.l.b16 %v1170
        %v1187 = vunpack.c.l.b16 %v1171
        %v1188 = vunpack.c.l.b16 %v1172
        %v1189 = vunpack.c.l.b16 %v1173
        %v1190 = vunpack.c.l.b16 %v1174
        %v1191 = vpack.c.b16 %v1184, %v1183
        %v1192 = vpack.c.b16 %v1186, %v1185
        %v1193 = vpack.c.b16 %v1188, %v1187
        %v1194 = vpack.c.b16 %v1190, %v1189
        %v1200 = vsel %vm1067, %v1166, 0
        %1202 = vmatprep.subr.bf16.mxu0 0
        %1203 = vmatpush1.bf16.msra.mxu0 %v1191
        %1204 = vmatprep.subr.bf16.mxu0 0
        %1205 = vmatpush1.bf16.msra.mxu0 %v1192
        %1206 = vmatprep.subr.bf16.mxu0 0
        %1207 = vmatpush1.bf16.msra.mxu0 %v1193
        %1208 = vmatprep.subr.bf16.mxu0 0
        %1209 = vmatpush1.bf16.msra.mxu0 %v1194
        %1210 = vmatprep.subr.bf16.mxu0 0
        %1211 = vmatpush1.bf16.msra.mxu0 0
        %1212 = vmatprep.subr.bf16.mxu0 0
        %1213 = vmatpush1.bf16.msra.mxu0 0
        %1214 = vmatprep.subr.bf16.mxu0 0
        %1215 = vmatpush1.bf16.msra.mxu0 0
        %1216 = vmatprep.subr.bf16.mxu0 0
        %1217 = vmatpush1.bf16.msra.mxu0 0
        %1218 = vmatprep.subr.bf16.mxu0 0
        %1219 = vmatpush1.bf16.msra.mxu0 0
        %1220 = vmatprep.subr.bf16.mxu0 0
        %1221 = vmatpush1.bf16.msra.mxu0 0
        %1222 = vmatprep.subr.bf16.mxu0 0
        %1223 = vmatpush1.bf16.msra.mxu0 0
        %1224 = vmatprep.subr.bf16.mxu0 0
        %1225 = vmatpush1.bf16.msra.mxu0 0
        %1226 = vmatprep.subr.bf16.mxu0 0
        %1227 = vmatpush1.bf16.msra.mxu0 0
        %1228 = vmatprep.subr.bf16.mxu0 0
        %1229 = vmatpush1.bf16.msra.mxu0 0
        %1230 = vmatprep.subr.bf16.mxu0 0
        %1231 = vmatpush1.bf16.msra.mxu0 0
        %1232 = vmatprep.subr.bf16.mxu0 0
        %1233 = vmatpush1.bf16.msra.mxu0 0
        %1234 = vmatprep.mubr.bf16.mxu0 0
        %1235 = vmatmul.mubr.bf16.gmra.mrb[0].mxu0 %v1200
        %v1236 = vpop.f32.mrb[0].mxu0
        %v1237 = vadd.f32 0.0, %v1236
        %v1238 = vpop.f32.mrb[0].mxu0
        %v1239 = vpop.f32.mrb[0].mxu0
        %v1240 = vpop.f32.mrb[0].mxu0
        %1241 = vdwg.mxu0
        %v1242 = vadd.f32 %v1161, %v1237
        %v1243 = vld [vmem:[#allocation6] sm:$0x1]
        %v1245 = vlaneseq
        %v1246 = vshrl.u32 %v1245, 7
        %v1247 = vsub.s32 0, %v1246
        %v1248 = vrot.slane %v1243, %v1247
        %v1250 = vadd.f32 %v1242, %v1248
        %1251 = vst [vmem:[%s475] sm:$0xff] %v1250
        %p1252 = scmp.lt.s32.totalorder %s26, 1
        %s1253 = scalar_select %p1252, %s26, 1
        %s1254 = smul.addr %s1253, 8
        %s1255 = scalar_lea.vmem %s13, %s1254
        // Predicated region
        $region85: #{wav2all_forward.1} parent=71 // pred_check
          %p1256 = pneg %p322
        $region86: #{wav2all_forward.1} parent=71 // pred_check_branch
          %1258 = sbr.rel (%p1256) target = $region88
        $region87: #{wav2all_forward.1} parent=71 // pred_region
          _
        $region88: #{wav2all_forward.1} parent=71 // pred_fallthru
          _
      $region72: #{wav2all_forward.1} parent=5 // pred_fallthru
        _
      %p1259 = scmp.le.s32.totalorder 2, %s21
      // Predicated region
      $region89: #{wav2all_forward.1} parent=5 // pred_check
        %p1260 = pneg %p1259
      $region90: #{wav2all_forward.1} parent=5 // pred_check_branch
        %1262 = sbr.rel (%p1260) target = $region92
      $region91: #{wav2all_forward.1} parent=5 // pred_region
        %s1263 = ssub.s32 %s21, 2
        // Predicated region
        $region93: #{wav2all_forward.1} parent=91 // pred_check
          %p1264 = pneg %p328
        $region94: #{wav2all_forward.1} parent=91 // pred_check_branch
          %1266 = sbr.rel (%p1264) target = $region96
        $region95: #{wav2all_forward.1} parent=91 // pred_region
          %p1267 = scmp.lt.s32.totalorder %s27, 1
          %s1268 = scalar_select %p1267, %s27, 1
          %s1269 = smul.addr %s1268, 8
          %s1270 = scalar_lea.vmem %s13, %s1269
        $region96: #{wav2all_forward.1} parent=91 // pred_fallthru
          _
      $region92: #{wav2all_forward.1} parent=5 // pred_fallthru
        _
    $region6: #{wav2all_forward.1} parent=1 // loop_footer
      %s25 = sadd.s32 1, %s21
    $region7: #{wav2all_forward.1} parent=1 // loop_footer_branch
      %20 = sbr.rel target = $region3
    $region8: #{wav2all_forward.1} parent=1 // loop_exit
      _
    %1271 = vsyncpa [#allocation3], 1
    %s1272 = scalar_lea.sflag [#allocation3], 1
    %1273 = vsyncpa %s1272, 1
    %1274 = vsyncpa [#allocation5], 1

</llo_original>
